<compile_context>
chip_gen: v7x
topology: tpu7x:2x2x1
jax: 0.10.0
libtpu: 0.0.40
codegen_flags: <defaults>
</compile_context>

<pallas_src>
import functools

import jax
import jax.numpy as jnp
from jax.experimental import pallas as pl
from jax.experimental.pallas import tpu as pltpu

BN_EPS = 1e-5
MAX_TM_MM = 512           # row-tile cap for plain matmul convs
MAX_TM_C3 = 256           # row-tile cap for the fused 3x3 conv kernel
VMEM_LIMIT = 40 * 1024 * 1024


def _round_up(x, m):
    return ((x + m - 1) // m) * m


def _pad_rows(a, rows, value=0.0):
    if rows == a.shape[0]:
        return a
    pads = [(0, rows - a.shape[0])] + [(0, 0)] * (a.ndim - 1)
    return jnp.pad(a, pads, constant_values=value)


# ---------------------------------------------------------------------------
# Pallas kernels
# ---------------------------------------------------------------------------
def _mm_kernel(relu, has_res, *refs):
    """out = relu?( (X @ W) * scale + bias [+ residual] ) — bf16 MXU, f32 epilogue."""
    if has_res:
        x_ref, w_ref, s_ref, b_ref, r_ref, o_ref = refs
    else:
        x_ref, w_ref, s_ref, b_ref, o_ref = refs
        r_ref = None
    y = jnp.dot(x_ref[...], w_ref[...], preferred_element_type=jnp.float32)
    y = y * s_ref[...] + b_ref[...]
    if r_ref is not None:
        y = y + r_ref[...].astype(jnp.float32)
    if relu:
        y = jnp.maximum(y, 0.0)
    o_ref[...] = y.astype(o_ref.dtype)


def _conv3x3_kernel(wp, tm, relu, xa_ref, xb_ref, w_ref, s_ref, b_ref, o_ref, buf_ref):
    """Fused 3x3 stride-1 conv on the flattened padded image.

    xa_ref: current (tm, Cin) row tile of the flattened padded input.
    xb_ref: next row tile (halo).  buf_ref: (2*tm, Cin) VMEM scratch.
    For tap t=(di,dj): lhs rows are shifted by di*Wp + dj, accumulated over 9 MXU dots.
    """
    buf_ref[0:tm, :] = xa_ref[...]
    buf_ref[tm:2 * tm, :] = xb_ref[...]
    acc = jnp.zeros(o_ref.shape, jnp.float32)
    for t in range(9):
        di, dj = divmod(t, 3)
        off = di * wp + dj
        acc = acc + jnp.dot(buf_ref[off:off + tm, :], w_ref[t],
                            preferred_element_type=jnp.float32)
    y = acc * s_ref[...] + b_ref[...]
    if relu:
        y = jnp.maximum(y, 0.0)
    o_ref[...] = y.astype(o_ref.dtype)


# ---------------------------------------------------------------------------
# Conv wrappers
# ---------------------------------------------------------------------------
def _matmul_bn_act(x2d, w2d, scale, bias, relu, residual=None):
    """x2d: (M,K) bf16, w2d: (K,Cout) bf16, scale/bias: (Cout,) f32 -> (M,Cout) bf16."""
    x2d = x2d.astype(jnp.bfloat16)
    M, K = x2d.shape
    Cout = w2d.shape[1]
    tm = min(MAX_TM_MM, _round_up(M, 16))
    m_pad = _round_up(M, tm)
    xp = _pad_rows(x2d, m_pad)
    s2 = scale.reshape(1, Cout).astype(jnp.float32)
    b2 = bias.reshape(1, Cout).astype(jnp.float32)

    in_specs = [pl.BlockSpec((tm, K), lambda i: (i, 0)),
                pl.BlockSpec((K, Cout), lambda i: (0, 0)),
                pl.BlockSpec((1, Cout), lambda i: (0, 0)),
                pl.BlockSpec((1, Cout), lambda i: (0, 0))]
    args = [xp, w2d, s2, b2]
    if residual is not None:
        in_specs.append(pl.BlockSpec((tm, Cout), lambda i: (i, 0)))
        args.append(_pad_rows(residual.astype(jnp.bfloat16), m_pad))

    out = pl.pallas_call(
        functools.partial(_mm_kernel, relu, residual is not None),
        grid=(m_pad // tm,),
        in_specs=in_specs,
        out_specs=pl.BlockSpec((tm, Cout), lambda i: (i, 0)),
        out_shape=jax.ShapeDtypeStruct((m_pad, Cout), jnp.bfloat16),
        compiler_params=pltpu.CompilerParams(
            dimension_semantics=("parallel",),
            vmem_limit_bytes=VMEM_LIMIT),
    )(*args)
    return out[:M]


def conv1x1_bn(x, p, stride=1, relu=False, residual=None):
    """1x1 conv + folded BN [+ residual] [+ ReLU].  x: (N,H,W,Cin) bf16."""
    if stride != 1:
        x = x[:, ::stride, ::stride, :]
    N, H, W, Cin = x.shape
    Cout = p["w"].shape[1]
    res2d = None if residual is None else residual.reshape(N * H * W, Cout)
    out = _matmul_bn_act(x.reshape(N * H * W, Cin), p["w"], p["scale"], p["bias"],
                         relu, residual=res2d)
    return out.reshape(N, H, W, Cout)


def conv3x3_s1_bn(x, p, relu=True):
    """3x3 stride-1 pad-1 conv + folded BN [+ ReLU], fused (no im2col in HBM)."""
    x = x.astype(jnp.bfloat16)
    N, H, W, Cin = x.shape
    Cout = p["w9"].shape[2]
    Hp, Wp = H + 2, W + 2
    xp = jnp.pad(x, ((0, 0), (1, 1), (1, 1), (0, 0)))
    x2 = xp.reshape(N * Hp * Wp, Cin)
    Mq = N * Hp * Wp
    tm = min(MAX_TM_C3, _round_up(Mq, 16))
    assert tm >= 2 * Wp + 2, "row tile too small for the 3x3 halo at this width"
    m_pad = _round_up(Mq, tm)
    # one extra zero tile so the halo block (i+1) of the last step is in range
    x2 = _pad_rows(x2, m_pad + tm)
    s2 = p["scale"].reshape(1, Cout)
    b2 = p["bias"].reshape(1, Cout)

    out = pl.pallas_call(
        functools.partial(_conv3x3_kernel, Wp, tm, relu),
        grid=(m_pad // tm,),
        in_specs=[pl.BlockSpec((tm, Cin), lambda i: (i, 0)),
                  pl.BlockSpec((tm, Cin), lambda i: (i + 1, 0)),
                  pl.BlockSpec((9, Cin, Cout), lambda i: (0, 0, 0)),
                  pl.BlockSpec((1, Cout), lambda i: (0, 0)),
                  pl.BlockSpec((1, Cout), lambda i: (0, 0))],
        out_specs=pl.BlockSpec((tm, Cout), lambda i: (i, 0)),
        out_shape=jax.ShapeDtypeStruct((m_pad, Cout), jnp.bfloat16),
        scratch_shapes=[pltpu.VMEM((2 * tm, Cin), jnp.bfloat16)],
        compiler_params=pltpu.CompilerParams(
            dimension_semantics=("parallel",),
            vmem_limit_bytes=VMEM_LIMIT),
    )(x2, x2, p["w9"], s2, b2)

    out = out[:Mq].reshape(N, Hp, Wp, Cout)
    return out[:, :H, :W, :]


def _im2col(x, kh, kw, stride, pad):
    """x: (N,H,W,C) -> patches (N,OH,OW,kh*kw*C) ordered (kh, kw, cin)."""
    N, H, W, C = x.shape
    xp = jnp.pad(x, ((0, 0), (pad, pad), (pad, pad), (0, 0)))
    OH = (H + 2 * pad - kh) // stride + 1
    OW = (W + 2 * pad - kw) // stride + 1
    cols = [xp[:, i:i + stride * OH:stride, j:j + stride * OW:stride, :]
            for i in range(kh) for j in range(kw)]
    return jnp.concatenate(cols, axis=-1), OH, OW


def conv_im2col_bn(x, p, kh, kw, stride, pad, relu=False):
    """General conv (7x7 stem, 3x3 stride-2) via im2col + fused matmul kernel."""
    x = x.astype(jnp.bfloat16)
    N = x.shape[0]
    patches, OH, OW = _im2col(x, kh, kw, stride, pad)
    Cout = p["wk"].shape[1]
    out = _matmul_bn_act(patches.reshape(N * OH * OW, -1), p["wk"],
                         p["scale"], p["bias"], relu)
    return out.reshape(N, OH, OW, Cout)


def maxpool_3x3_s2(x):
    """nn.MaxPool2d(3, stride=2, padding=1) as a plain-JAX 9-way shifted max (NHWC)."""
    N, H, W, C = x.shape
    k, stride, pad = 3, 2, 1
    neg = jnp.finfo(x.dtype).min
    xp = jnp.pad(x, ((0, 0), (pad, pad), (pad, pad), (0, 0)), constant_values=neg)
    OH = (H + 2 * pad - k) // stride + 1
    OW = (W + 2 * pad - k) // stride + 1
    out = None
    for i in range(k):
        for j in range(k):
            win = xp[:, i:i + stride * OH:stride, j:j + stride * OW:stride, :]
            out = win if out is None else jnp.maximum(out, win)
    return out


# ---------------------------------------------------------------------------
# Parameters: deterministic __init__ scheme of ResNet(Bottleneck, [3, 8, 36, 3])
# ---------------------------------------------------------------------------
def init_resnet152_params(key, in_channel=3, width=1):
    base = int(64 * width)
    layers_cfg = [(base, 3, 1), (base * 2, 8, 2), (base * 4, 36, 2), (base * 8, 3, 2)]
    expansion = 4
    keys = iter(jax.random.split(key, 256))

    def conv_w(cout, cin, kh, kw):
        n = kh * kw * cout
        return (jax.random.normal(next(keys), (cout, cin, kh, kw), jnp.float32)
                * jnp.float32((2.0 / n) ** 0.5))

    def bn_p(c):
        return dict(gamma=jnp.ones((c,), jnp.float32), beta=jnp.zeros((c,), jnp.float32),
                    mean=jnp.zeros((c,), jnp.float32), var=jnp.ones((c,), jnp.float32))

    params = {"conv1": conv_w(64, in_channel, 7, 7), "bn1": bn_p(64)}
    inplanes = 64
    for li, (planes, blocks, stride) in enumerate(layers_cfg, start=1):
        layer = []
        for bi in range(blocks):
            s = stride if bi == 0 else 1
            blk = {"conv1": conv_w(planes, inplanes, 1, 1), "bn1": bn_p(planes),
                   "conv2": conv_w(planes, planes, 3, 3), "bn2": bn_p(planes),
                   "conv3": conv_w(planes * expansion, planes, 1, 1),
                   "bn3": bn_p(planes * expansion),
                   "stride": s}
            if s != 1 or inplanes != planes * expansion:
                blk["down_conv"] = conv_w(planes * expansion, inplanes, 1, 1)
                blk["down_bn"] = bn_p(planes * expansion)
            inplanes = planes * expansion
            layer.append(blk)
        params[f"layer{li}"] = layer
    return params


def _fold_bn(bn):
    scale = bn["gamma"] / jnp.sqrt(bn["var"] + BN_EPS)
    bias = bn["beta"] - bn["mean"] * scale
    return scale.astype(jnp.float32), bias.astype(jnp.float32)


def _prep_1x1(w, bn):
    scale, bias = _fold_bn(bn)
    return {"w": jnp.transpose(w[:, :, 0, 0], (1, 0)).astype(jnp.bfloat16),
            "scale": scale, "bias": bias}


def _prep_3x3_s1(w, bn):
    scale, bias = _fold_bn(bn)
    cout, cin = w.shape[0], w.shape[1]
    w9 = jnp.transpose(w, (2, 3, 1, 0)).reshape(9, cin, cout)   # tap t = 3*kh + kw
    return {"w9": w9.astype(jnp.bfloat16), "scale": scale, "bias": bias}


def _prep_im2col(w, bn):
    scale, bias = _fold_bn(bn)
    cout, cin, kh, kw = w.shape
    wk = jnp.transpose(w, (2, 3, 1, 0)).reshape(kh * kw * cin, cout)  # (kh,kw,cin) order
    return {"wk": wk.astype(jnp.bfloat16), "scale": scale, "bias": bias}


def prepare_params(raw):
    """One-time preprocessing: fold BN, transpose weights, cast to bf16."""
    prep = {"conv1": _prep_im2col(raw["conv1"], raw["bn1"])}
    for li in range(1, 5):
        layer = []
        for blk in raw[f"layer{li}"]:
            p = {"stride": blk["stride"],
                 "conv1": _prep_1x1(blk["conv1"], blk["bn1"]),
                 "conv3": _prep_1x1(blk["conv3"], blk["bn3"])}
            if blk["stride"] == 1:
                p["conv2"] = _prep_3x3_s1(blk["conv2"], blk["bn2"])
            else:
                p["conv2"] = _prep_im2col(blk["conv2"], blk["bn2"])
            if "down_conv" in blk:
                p["down"] = _prep_1x1(blk["down_conv"], blk["down_bn"])
            layer.append(p)
        prep[f"layer{li}"] = layer
    return prep


# ---------------------------------------------------------------------------
# Forward pass (eval-mode)
# ---------------------------------------------------------------------------
def bottleneck_fwd(x, p):
    s = p["stride"]
    out = conv1x1_bn(x, p["conv1"], stride=1, relu=True)
    if s == 1:
        out = conv3x3_s1_bn(out, p["conv2"], relu=True)
    else:
        out = conv_im2col_bn(out, p["conv2"], 3, 3, s, 1, relu=True)
    if "down" in p:
        residual = conv1x1_bn(x, p["down"], stride=s, relu=False)
    else:
        residual = x
    # conv3 + bn3 + residual add + relu, fused into one Pallas kernel
    return conv1x1_bn(out, p["conv3"], stride=1, relu=True, residual=residual)


def resnet152_fwd(x_nhwc, prep):
    """Returns (x4, x5, x6, x7, x8) in NHWC — matches ResNet.forward (layer=7 path)."""
    x = conv_im2col_bn(x_nhwc, prep["conv1"], 7, 7, 2, 3, relu=True)   # conv1+bn1+relu
    x4 = maxpool_3x3_s2(x)
    feats = [x4]
    x = x4
    for li in range(1, 5):
        for p in prep[f"layer{li}"]:
            x = bottleneck_fwd(x, p)
        feats.append(x)
    return tuple(feats)


def ins_resnet152_fwd(x_nchw, prep):
    """InsResNet152.forward: encoder(x) -> 5 NCHW feature maps (DataParallel is a no-op)."""
    x = jnp.transpose(x_nchw, (0, 2, 3, 1)).astype(jnp.bfloat16)
    feats = resnet152_fwd(x, prep)
    return tuple(jnp.transpose(f.astype(jnp.float32), (0, 3, 1, 2)) for f in feats)


# ---------------------------------------------------------------------------
if __name__ == "__main__":
    key = jax.random.PRNGKey(0)
    kx, kp = jax.random.split(key)

    # Small NCHW input (batch=2, 3 channels, 64x64 so the deepest stage is still 2x2)
    x = jax.random.normal(kx, (2, 3, 64, 64), jnp.float32)

    raw_params = init_resnet152_params(kp, in_channel=3, width=1)
    params = prepare_params(raw_params)

    feats = ins_resnet152_fwd(x, params)
    jax.block_until_ready(feats)

    expected = [(2, 64, 16, 16), (2, 256, 16, 16), (2, 512, 8, 8),
                (2, 1024, 4, 4), (2, 2048, 2, 2)]
    assert [tuple(f.shape) for f in feats] == expected, [tuple(f.shape) for f in feats]
    assert all(bool(jnp.all(jnp.isfinite(f))) for f in feats)

    print("KERNEL_OK")
</pallas_src>

<mosaic_0001>
module attributes {stable_mosaic.version = 11 : i64} {
  func.func @_mm_kernel(%arg0: i32, %arg1: memref<512x147xbf16, #tpu.memory_space<vmem>>, %arg2: memref<147x64xbf16, #tpu.memory_space<vmem>>, %arg3: memref<1x64xf32, #tpu.memory_space<vmem>>, %arg4: memref<1x64xf32, #tpu.memory_space<vmem>>, %arg5: memref<512x64xbf16, #tpu.memory_space<vmem>>) attributes {dimension_semantics = [#tpu.dimension_semantics<parallel>], iteration_bounds = array<i64: 4>, scalar_prefetch = 0 : i64, scratch_operands = 0 : i64, tpu.core_type = #tpu.core_type<tc>, window_params = [{transform_indices = @transform_0, window_bounds = array<i64: 512, 147>}, {pipeline_mode = #tpu.pipeline_mode<synchronous>, transform_indices = @transform_1, window_bounds = array<i64: 147, 64>}, {pipeline_mode = #tpu.pipeline_mode<synchronous>, transform_indices = @transform_2, window_bounds = array<i64: 1, 64>}, {pipeline_mode = #tpu.pipeline_mode<synchronous>, transform_indices = @transform_3, window_bounds = array<i64: 1, 64>}, {transform_indices = @transform_4, window_bounds = array<i64: 512, 64>}]} {
    %c0 = arith.constant 0 : index
    %c0_0 = arith.constant 0 : index
    %0 = vector.load %arg1[%c0, %c0_0] : memref<512x147xbf16, #tpu.memory_space<vmem>>, vector<512x147xbf16>
    %c0_1 = arith.constant 0 : index
    %c0_2 = arith.constant 0 : index
    %1 = vector.load %arg2[%c0_1, %c0_2] : memref<147x64xbf16, #tpu.memory_space<vmem>>, vector<147x64xbf16>
    %cst = arith.constant dense<0.000000e+00> : vector<512x64xf32>
    %2 = tpu.matmul %0, %1, %cst {dimension_numbers = #tpu.dot_dimension_numbers<[1], [0], [0], [1], [0, 0, 1, 1], [], []>} : vector<512x147xbf16>, vector<147x64xbf16>, vector<512x64xf32> -> vector<512x64xf32>
    %c0_3 = arith.constant 0 : index
    %c0_4 = arith.constant 0 : index
    %3 = vector.load %arg3[%c0_3, %c0_4] : memref<1x64xf32, #tpu.memory_space<vmem>>, vector<1x64xf32>
    %4 = vector.broadcast %3 : vector<1x64xf32> to vector<512x64xf32>
    %5 = arith.mulf %2, %4 : vector<512x64xf32>
    %c0_5 = arith.constant 0 : index
    %c0_6 = arith.constant 0 : index
    %6 = vector.load %arg4[%c0_5, %c0_6] : memref<1x64xf32, #tpu.memory_space<vmem>>, vector<1x64xf32>
    %7 = vector.broadcast %6 : vector<1x64xf32> to vector<512x64xf32>
    %8 = arith.addf %5, %7 : vector<512x64xf32>
    %cst_7 = arith.constant 0.000000e+00 : f32
    %9 = vector.broadcast %cst_7 : f32 to vector<512x64xf32>
    %10 = arith.maximumf %8, %9 : vector<512x64xf32>
    %11 = arith.truncf %10 : vector<512x64xf32> to vector<512x64xbf16>
    %c0_8 = arith.constant 0 : index
    %c0_9 = arith.constant 0 : index
    %12 = vector.load %arg5[%c0_8, %c0_9] : memref<512x64xbf16, #tpu.memory_space<vmem>>, vector<512x64xbf16>
    tpu.vector_store %arg5[%c0_8, %c0_9], %11 {strides = array<i32>} : memref<512x64xbf16, #tpu.memory_space<vmem>>, vector<512x64xbf16>,
    return
  }
  func.func @transform_0(%arg0: i32) -> (i32, i32) {
    %c0_i32 = arith.constant 0 : i32
    %c0_i32_0 = arith.constant 0 : i32
    return %arg0, %c0_i32 : i32, i32
  }
  func.func @transform_1(%arg0: i32) -> (i32, i32) {
    %c0_i32 = arith.constant 0 : i32
    %c0_i32_0 = arith.constant 0 : i32
    %c0_i32_1 = arith.constant 0 : i32
    return %c0_i32, %c0_i32_0 : i32, i32
  }
  func.func @transform_2(%arg0: i32) -> (i32, i32) {
    %c0_i32 = arith.constant 0 : i32
    %c0_i32_0 = arith.constant 0 : i32
    %c0_i32_1 = arith.constant 0 : i32
    return %c0_i32, %c0_i32_0 : i32, i32
  }
  func.func @transform_3(%arg0: i32) -> (i32, i32) {
    %c0_i32 = arith.constant 0 : i32
    %c0_i32_0 = arith.constant 0 : i32
    %c0_i32_1 = arith.constant 0 : i32
    return %c0_i32, %c0_i32_0 : i32, i32
  }
  func.func @transform_4(%arg0: i32) -> (i32, i32) {
    %c0_i32 = arith.constant 0 : i32
    %c0_i32_0 = arith.constant 0 : i32
    return %arg0, %c0_i32 : i32, i32
  }
}

</mosaic_0001>

<llo_original>
// kernel: tpu_custom_call.1
$region0: #{tpu_custom_call.1}
  #allocation0 [shape = 'u32[]', space=smem, size = 0x4, offset = 0x4, fixed_abs, tag = 'smem constant byte address 0x4 - core index']
  #allocation1 [shape = 'u32[144,128]{1,0:T(1,128)}', space=vmem, size = 0x12000, scoped, tag = 'internal scratch']
  %s0 = inlined_call_operand.vmem [shape: bf16[2048,147], index: 0, kind: input, shape index: {}]
  %s1 = inlined_call_operand.vmem [shape: bf16[147,64], index: 1, kind: input, shape index: {}]
  %s2 = inlined_call_operand.vmem [shape: f32[1,64], index: 2, kind: input, shape index: {}]
  %s3 = inlined_call_operand.vmem [shape: f32[1,64], index: 3, kind: input, shape index: {}]
  %s4 = inlined_call_operand.vmem [shape: bf16[2048,64], index: 4, kind: output, shape index: {}]
  %s5 = sld [smem:[#allocation0]]
  $region49: #{tpu_custom_call.1} parent=0
    _
  %s7 = ssub.s32 1, %s5
  %s8 = scalar_select 0, %s7, %s5
  loop: start=0, step=1, limit=6
  $region2: #{tpu_custom_call.1} parent=0 // loop_pre_header
    _
  $region3: #{tpu_custom_call.1} parent=0 // loop_header
    %s10 = sphi 0, %s14
    %p11 = scmp.ge.s32.totalorder %s10, 6
    %s20 = sphi 0, %s22
    %s23 = sphi 0, %s20
    %s24 = sphi 0, %s23
    %s40 = sphi 0, %s24
    %s44 = sphi 0, %s44
    %s46 = sphi 0, %s44
    %s47 = sphi 0, %s46
    %s61 = sphi 0, %s47
    %s65 = sphi 0, %s65
    %s67 = sphi 0, %s65
    %s68 = sphi 0, %s67
    %s82 = sphi 0, %s68
    %s86 = sphi 0, %s86
    %s88 = sphi 0, %s86
    %s89 = sphi 0, %s88
    %s103 = sphi 0, %s89
    %s109 = sphi 0, %s111
    %s112 = sphi 0, %s109
    %s113 = sphi 0, %s112
    %s129 = sphi 0, %s113
  $region4: #{tpu_custom_call.1} parent=0 // loop_header_branch
    %13 = sbr.rel (%p11) target = $region8
  $region5: #{tpu_custom_call.1} parent=0 // loop_body
    %s15 = ssub.s32 %s10, 1
    %s16 = ssub.s32 %s10, 2
    %s17 = sadd.s32 %s10, 1
    %s18 = ssub.s32 %s10, %s17
    %p19 = scmp.eq.s32.totalorder %s18, 0
    %s21 = sadd.s32 %s20, 1
    %s22 = scalar_select %p19, %s20, %s21
    %p25 = pneg %p19
    %p26 = scmp.eq.s32.totalorder %s10, 3
    %p27 = por %p25, %p26
    %p28 = scmp.ne.s32.totalorder %s20, %s23
    %p29 = scmp.eq.s32.totalorder %s10, 0
    %p30 = por %p28, %p29
    %p31 = scmp.ne.s32.totalorder %s20, %s23
    %p32 = scmp.eq.s32.totalorder %s15, 3
    %p33 = por %p31, %p32
    %p34 = scmp.ne.s32.totalorder %s23, %s24
    %p35 = scmp.eq.s32.totalorder %s15, 0
    %p36 = por %p34, %p35
    %p37 = scmp.ne.s32.totalorder %s23, %s24
    %p38 = scmp.eq.s32.totalorder %s16, 3
    %p39 = por %p37, %p38
    %p41 = scmp.ne.s32.totalorder %s24, %s40
    %p42 = scmp.eq.s32.totalorder %s16, 0
    %p43 = por %p41, %p42
    %s45 = sadd.s32 %s44, 1
    %p48 = scmp.eq.s32.totalorder %s10, 3
    %p49 = scmp.ne.s32.totalorder %s44, %s46
    %p50 = scmp.eq.s32.totalorder %s10, 0
    %p51 = por %p49, %p50
    %p52 = scmp.ne.s32.totalorder %s44, %s46
    %p53 = scmp.eq.s32.totalorder %s15, 3
    %p54 = por %p52, %p53
    %p55 = scmp.ne.s32.totalorder %s46, %s47
    %p56 = scmp.eq.s32.totalorder %s15, 0
    %p57 = por %p55, %p56
    %p58 = scmp.ne.s32.totalorder %s46, %s47
    %p59 = scmp.eq.s32.totalorder %s16, 3
    %p60 = por %p58, %p59
    %p62 = scmp.ne.s32.totalorder %s47, %s61
    %p63 = scmp.eq.s32.totalorder %s16, 0
    %p64 = por %p62, %p63
    %s66 = sadd.s32 %s65, 1
    %p69 = scmp.eq.s32.totalorder %s10, 3
    %p70 = scmp.ne.s32.totalorder %s65, %s67
    %p71 = scmp.eq.s32.totalorder %s10, 0
    %p72 = por %p70, %p71
    %p73 = scmp.ne.s32.totalorder %s65, %s67
    %p74 = scmp.eq.s32.totalorder %s15, 3
    %p75 = por %p73, %p74
    %p76 = scmp.ne.s32.totalorder %s67, %s68
    %p77 = scmp.eq.s32.totalorder %s15, 0
    %p78 = por %p76, %p77
    %p79 = scmp.ne.s32.totalorder %s67, %s68
    %p80 = scmp.eq.s32.totalorder %s16, 3
    %p81 = por %p79, %p80
    %p83 = scmp.ne.s32.totalorder %s68, %s82
    %p84 = scmp.eq.s32.totalorder %s16, 0
    %p85 = por %p83, %p84
    %s87 = sadd.s32 %s86, 1
    %p90 = scmp.eq.s32.totalorder %s10, 3
    %p91 = scmp.ne.s32.totalorder %s86, %s88
    %p92 = scmp.eq.s32.totalorder %s10, 0
    %p93 = por %p91, %p92
    %p94 = scmp.ne.s32.totalorder %s86, %s88
    %p95 = scmp.eq.s32.totalorder %s15, 3
    %p96 = por %p94, %p95
    %p97 = scmp.ne.s32.totalorder %s88, %s89
    %p98 = scmp.eq.s32.totalorder %s15, 0
    %p99 = por %p97, %p98
    %p100 = scmp.ne.s32.totalorder %s88, %s89
    %p101 = scmp.eq.s32.totalorder %s16, 3
    %p102 = por %p100, %p101
    %p104 = scmp.ne.s32.totalorder %s89, %s103
    %p105 = scmp.eq.s32.totalorder %s16, 0
    %p106 = por %p104, %p105
    %s107 = ssub.s32 %s10, %s17
    %p108 = scmp.eq.s32.totalorder %s107, 0
    %s110 = sadd.s32 %s109, 1
    %s111 = scalar_select %p108, %s109, %s110
    %p114 = pneg %p108
    %p115 = scmp.eq.s32.totalorder %s10, 3
    %p116 = por %p114, %p115
    %p117 = scmp.ne.s32.totalorder %s109, %s112
    %p118 = scmp.eq.s32.totalorder %s10, 0
    %p119 = por %p117, %p118
    %p120 = scmp.ne.s32.totalorder %s109, %s112
    %p121 = scmp.eq.s32.totalorder %s15, 3
    %p122 = por %p120, %p121
    %p123 = scmp.ne.s32.totalorder %s112, %s113
    %p124 = scmp.eq.s32.totalorder %s15, 0
    %p125 = por %p123, %p124
    %p126 = scmp.ne.s32.totalorder %s112, %s113
    %p127 = scmp.eq.s32.totalorder %s16, 3
    %p128 = por %p126, %p127
    %p130 = scmp.ne.s32.totalorder %s113, %s129
    %p131 = scmp.eq.s32.totalorder %s16, 0
    %p132 = por %p130, %p131
    %p133 = scmp.le.s32.totalorder 1, %s10
    %p134 = scmp.lt.s32.totalorder %s10, 5
    %p135 = pnand %p133, %p134
    %p136 = pneg %p135
    // Predicated region
    $region9: #{tpu_custom_call.1} parent=5 // pred_check
      _
    $region10: #{tpu_custom_call.1} parent=5 // pred_check_branch
      %138 = sbr.rel (%p135) target = $region12
    $region11: #{tpu_custom_call.1} parent=5 // pred_region
      %s139 = ssub.s32 %s10, 1
      // Predicated region
      $region13: #{tpu_custom_call.1} parent=11 // pred_check
        %p140 = pneg %p57
      $region14: #{tpu_custom_call.1} parent=11 // pred_check_branch
        %142 = sbr.rel (%p140) target = $region16
      $region15: #{tpu_custom_call.1} parent=11 // pred_region
        _
      $region16: #{tpu_custom_call.1} parent=11 // pred_fallthru
        _
      // Predicated region
      $region17: #{tpu_custom_call.1} parent=11 // pred_check
        %p143 = pneg %p78
      $region18: #{tpu_custom_call.1} parent=11 // pred_check_branch
        %145 = sbr.rel (%p143) target = $region20
      $region19: #{tpu_custom_call.1} parent=11 // pred_region
        _
      $region20: #{tpu_custom_call.1} parent=11 // pred_fallthru
        _
      // Predicated region
      $region21: #{tpu_custom_call.1} parent=11 // pred_check
        %p146 = pneg %p99
      $region22: #{tpu_custom_call.1} parent=11 // pred_check_branch
        %148 = sbr.rel (%p146) target = $region24
      $region23: #{tpu_custom_call.1} parent=11 // pred_region
        _
      $region24: #{tpu_custom_call.1} parent=11 // pred_fallthru
        _
    $region12: #{tpu_custom_call.1} parent=5 // pred_fallthru
      _
    %p149 = scmp.lt.s32.totalorder %s10, 4
    // Predicated region
    $region25: #{tpu_custom_call.1} parent=5 // pred_check
      %p150 = pneg %p149
    $region26: #{tpu_custom_call.1} parent=5 // pred_check_branch
      %152 = sbr.rel (%p150) target = $region28
    $region27: #{tpu_custom_call.1} parent=5 // pred_region
      // Predicated region
      $region29: #{tpu_custom_call.1} parent=27 // pred_check
        %p153 = pneg %p30
      $region30: #{tpu_custom_call.1} parent=27 // pred_check_branch
        %155 = sbr.rel (%p153) target = $region32
      $region31: #{tpu_custom_call.1} parent=27 // pred_region
        %s156 = smul.u32 64, %s10
        %p157 = scmp.lt.s32.totalorder %s156, 255
        %s158 = scalar_select %p157, %s156, 255
        %s159 = smul.addr %s158, 2
        %s160 = smul.addr %s159, 4
        %s161 = scalar_lea.vmem %s0, %s160
        %s162 = smul.u32 64, %s10
      $region32: #{tpu_custom_call.1} parent=27 // pred_fallthru
        _
    $region28: #{tpu_custom_call.1} parent=5 // pred_fallthru
      _
    %p163 = scmp.le.s32.totalorder 1, %s10
    %p164 = scmp.lt.s32.totalorder %s10, 5
    %p165 = pnand %p163, %p164
    %p166 = pneg %p165
    // Predicated region
    $region33: #{tpu_custom_call.1} parent=5 // pred_check
      _
    $region34: #{tpu_custom_call.1} parent=5 // pred_check_branch
      %168 = sbr.rel (%p165) target = $region36
    $region35: #{tpu_custom_call.1} parent=5 // pred_region
      %s169 = ssub.s32 %s10, 1
      %s170 = smul.u32 64, %s15
      %p171 = scmp.lt.s32.totalorder %s170, 255
      %s172 = scalar_select %p171, %s170, 255
      %s173 = smul.addr %s172, 2
      %s174 = smul.addr %s173, 4
      %s175 = scalar_lea.vmem %s0, %s174
      %p176 = pneg %p36
      %p177 = pneg %p33
      %p178 = pneg %p57
      %p179 = pneg %p54
      %p180 = pneg %p78
      %p181 = pneg %p75
      %p182 = pneg %p99
      %p183 = pneg %p96
      %p184 = pneg %p125
      %p185 = pneg %p122
      %s186 = smul.u32 64, %s15
      %p187 = scmp.lt.s32.totalorder %s186, 255
      %s188 = scalar_select %p187, %s186, 255
      %s189 = smul.addr %s188, 4
      %s190 = scalar_lea.vmem %s4, %s189
      %s191 = smul.u32 64, %s15
      %p192 = scmp.lt.s32.totalorder %s191, 255
      %s193 = scalar_select %p192, %s191, 255
      %s194 = smul.addr %s193, 2
      %s195 = smul.addr %s194, 4
      %s196 = scalar_lea.vmem %s0, %s195
      %s197 = smul.u32 64, %s15
      %s198 = smul.u32 64, %s15
      %p199 = scmp.lt.s32.totalorder %s198, 255
      %s200 = scalar_select %p199, %s198, 255
      %s201 = smul.addr %s200, 4
      %s202 = scalar_lea.vmem %s4, %s201
      %s203 = smul.u32 64, %s15
      %v205 = vld [vmem:[%s196] sm:$0xff]
      %v206 = vld [vmem:[%s196 + $0x8] sm:$0xff]
      %v207 = vld [vmem:[%s196 + $0x10] sm:$0xff]
      %v208 = vld [vmem:[%s196 + $0x18] sm:$0xff]
      %v209 = vld [vmem:[%s196 + $0x20] sm:$0xff]
      %v210 = vld [vmem:[%s196 + $0x28] sm:$0xff]
      %v211 = vld [vmem:[%s196 + $0x30] sm:$0xff]
      %v212 = vld [vmem:[%s196 + $0x38] sm:$0xff]
      %v213 = vld [vmem:[%s196 + $0x40] sm:$0xff]
      %v214 = vld [vmem:[%s196 + $0x48] sm:$0xff]
      %v215 = vld [vmem:[%s196 + $0x50] sm:$0xff]
      %v216 = vld [vmem:[%s196 + $0x58] sm:$0xff]
      %v217 = vld [vmem:[%s196 + $0x60] sm:$0xff]
      %v218 = vld [vmem:[%s196 + $0x68] sm:$0xff]
      %v219 = vld [vmem:[%s196 + $0x70] sm:$0xff]
      %v220 = vld [vmem:[%s196 + $0x78] sm:$0xff]
      %v221 = vld [vmem:[%s196 + $0x80] sm:$0xff]
      %v222 = vld [vmem:[%s196 + $0x88] sm:$0xff]
      %v223 = vld [vmem:[%s196 + $0x90] sm:$0xff]
      %v224 = vld [vmem:[%s196 + $0x98] sm:$0xff]
      %v225 = vld [vmem:[%s196 + $0xa0] sm:$0xff]
      %v226 = vld [vmem:[%s196 + $0xa8] sm:$0xff]
      %v227 = vld [vmem:[%s196 + $0xb0] sm:$0xff]
      %v228 = vld [vmem:[%s196 + $0xb8] sm:$0xff]
      %v229 = vld [vmem:[%s196 + $0xc0] sm:$0xff]
      %v230 = vld [vmem:[%s196 + $0xc8] sm:$0xff]
      %v231 = vld [vmem:[%s196 + $0xd0] sm:$0xff]
      %v232 = vld [vmem:[%s196 + $0xd8] sm:$0xff]
      %v233 = vld [vmem:[%s196 + $0xe0] sm:$0xff]
      %v234 = vld [vmem:[%s196 + $0xe8] sm:$0xff]
      %v235 = vld [vmem:[%s196 + $0xf0] sm:$0xff]
      %v236 = vld [vmem:[%s196 + $0xf8] sm:$0xff]
      %v237 = vld [vmem:[%s196 + $0x100] sm:$0xff]
      %v238 = vld [vmem:[%s196 + $0x108] sm:$0xff]
      %v239 = vld [vmem:[%s196 + $0x110] sm:$0xff]
      %v240 = vld [vmem:[%s196 + $0x118] sm:$0xff]
      %v241 = vld [vmem:[%s196 + $0x120] sm:$0xff]
      %v242 = vld [vmem:[%s196 + $0x128] sm:$0xff]
      %v243 = vld [vmem:[%s196 + $0x130] sm:$0xff]
      %v244 = vld [vmem:[%s196 + $0x138] sm:$0xff]
      %v245 = vld [vmem:[%s196 + $0x140] sm:$0xff]
      %v246 = vld [vmem:[%s196 + $0x148] sm:$0xff]
      %v247 = vld [vmem:[%s196 + $0x150] sm:$0xff]
      %v248 = vld [vmem:[%s196 + $0x158] sm:$0xff]
      %v249 = vld [vmem:[%s196 + $0x160] sm:$0xff]
      %v250 = vld [vmem:[%s196 + $0x168] sm:$0xff]
      %v251 = vld [vmem:[%s196 + $0x170] sm:$0xff]
      %v252 = vld [vmem:[%s196 + $0x178] sm:$0xff]
      %v253 = vld [vmem:[%s196 + $0x180] sm:$0xff]
      %v254 = vld [vmem:[%s196 + $0x188] sm:$0xff]
      %v255 = vld [vmem:[%s196 + $0x190] sm:$0xff]
      %v256 = vld [vmem:[%s196 + $0x198] sm:$0xff]
      %v257 = vld [vmem:[%s196 + $0x1a0] sm:$0xff]
      %v258 = vld [vmem:[%s196 + $0x1a8] sm:$0xff]
      %v259 = vld [vmem:[%s196 + $0x1b0] sm:$0xff]
      %v260 = vld [vmem:[%s196 + $0x1b8] sm:$0xff]
      %v261 = vld [vmem:[%s196 + $0x1c0] sm:$0xff]
      %v262 = vld [vmem:[%s196 + $0x1c8] sm:$0xff]
      %v263 = vld [vmem:[%s196 + $0x1d0] sm:$0xff]
      %v264 = vld [vmem:[%s196 + $0x1d8] sm:$0xff]
      %v265 = vld [vmem:[%s196 + $0x1e0] sm:$0xff]
      %v266 = vld [vmem:[%s196 + $0x1e8] sm:$0xff]
      %v267 = vld [vmem:[%s196 + $0x1f0] sm:$0xff]
      %v268 = vld [vmem:[%s196 + $0x1f8] sm:$0xff]
      %v269 = vld [vmem:[%s1] sm:$0xf]
      %v270 = vld [vmem:[%s1 + $0x4] sm:$0xf]
      %v271 = vld [vmem:[%s1 + $0x8] sm:$0xf]
      %v272 = vld [vmem:[%s1 + $0xc] sm:$0xf]
      %v273 = vld [vmem:[%s1 + $0x10] sm:$0xf]
      %v274 = vld [vmem:[%s1 + $0x14] sm:$0xf]
      %v275 = vld [vmem:[%s1 + $0x18] sm:$0xf]
      %v276 = vld [vmem:[%s1 + $0x1c] sm:$0xf]
      %v277 = vld [vmem:[%s1 + $0x20] sm:$0xf]
      %v278 = vld [vmem:[%s1 + $0x24] sm:$0xf]
      %v279 = vld [vmem:[%s1 + $0x28] sm:$0xf]
      %v280 = vld [vmem:[%s1 + $0x2c] sm:$0xf]
      %v281 = vld [vmem:[%s1 + $0x30] sm:$0xf]
      %v282 = vld [vmem:[%s1 + $0x34] sm:$0xf]
      %v283 = vld [vmem:[%s1 + $0x38] sm:$0xf]
      %v284 = vld [vmem:[%s1 + $0x3c] sm:$0xf]
      %v285 = vld [vmem:[%s1 + $0x40] sm:$0xf]
      %v286 = vld [vmem:[%s1 + $0x44] sm:$0xf]
      %v287 = vld [vmem:[%s1 + $0x48] sm:$0x3]
      %v352 = vunpack.c.l.b16 %v205
      %v353 = vunpack.c.h.b16 %v205
      %v354 = vunpack.c.l.b16 %v206
      %v355 = vunpack.c.h.b16 %v206
      %v356 = vunpack.c.l.b16 %v207
      %v357 = vunpack.c.h.b16 %v207
      %v358 = vunpack.c.l.b16 %v208
      %v359 = vunpack.c.h.b16 %v208
      %v360 = vunpack.c.l.b16 %v209
      %v361 = vunpack.c.h.b16 %v209
      %v362 = vunpack.c.l.b16 %v210
      %v363 = vunpack.c.h.b16 %v210
      %v364 = vunpack.c.l.b16 %v211
      %v365 = vunpack.c.h.b16 %v211
      %v366 = vunpack.c.l.b16 %v212
      %v367 = vunpack.c.h.b16 %v212
      %v368 = vunpack.c.l.b16 %v213
      %v369 = vunpack.c.h.b16 %v213
      %v370 = vunpack.c.l.b16 %v214
      %v371 = vunpack.c.h.b16 %v214
      %v372 = vunpack.c.l.b16 %v215
      %v373 = vunpack.c.h.b16 %v215
      %v374 = vunpack.c.l.b16 %v216
      %v375 = vunpack.c.h.b16 %v216
      %v376 = vunpack.c.l.b16 %v217
      %v377 = vunpack.c.h.b16 %v217
      %v378 = vunpack.c.l.b16 %v218
      %v379 = vunpack.c.h.b16 %v218
      %v380 = vunpack.c.l.b16 %v219
      %v381 = vunpack.c.h.b16 %v219
      %v382 = vunpack.c.l.b16 %v220
      %v383 = vunpack.c.h.b16 %v220
      %v384 = vunpack.c.l.b16 %v221
      %v385 = vunpack.c.h.b16 %v221
      %v386 = vunpack.c.l.b16 %v222
      %v387 = vunpack.c.h.b16 %v222
      %v388 = vunpack.c.l.b16 %v223
      %v389 = vunpack.c.h.b16 %v223
      %v390 = vunpack.c.l.b16 %v224
      %v391 = vunpack.c.h.b16 %v224
      %v392 = vunpack.c.l.b16 %v225
      %v393 = vunpack.c.h.b16 %v225
      %v394 = vunpack.c.l.b16 %v226
      %v395 = vunpack.c.h.b16 %v226
      %v396 = vunpack.c.l.b16 %v227
      %v397 = vunpack.c.h.b16 %v227
      %v398 = vunpack.c.l.b16 %v228
      %v399 = vunpack.c.h.b16 %v228
      %v400 = vunpack.c.l.b16 %v229
      %v401 = vunpack.c.h.b16 %v229
      %v402 = vunpack.c.l.b16 %v230
      %v403 = vunpack.c.h.b16 %v230
      %v404 = vunpack.c.l.b16 %v231
      %v405 = vunpack.c.h.b16 %v231
      %v406 = vunpack.c.l.b16 %v232
      %v407 = vunpack.c.h.b16 %v232
      %v408 = vunpack.c.l.b16 %v233
      %v409 = vunpack.c.h.b16 %v233
      %v410 = vunpack.c.l.b16 %v234
      %v411 = vunpack.c.h.b16 %v234
      %v412 = vunpack.c.l.b16 %v235
      %v413 = vunpack.c.h.b16 %v235
      %v414 = vunpack.c.l.b16 %v236
      %v415 = vunpack.c.h.b16 %v236
      %v416 = vunpack.c.l.b16 %v237
      %v417 = vunpack.c.h.b16 %v237
      %v418 = vunpack.c.l.b16 %v238
      %v419 = vunpack.c.h.b16 %v238
      %v420 = vunpack.c.l.b16 %v239
      %v421 = vunpack.c.h.b16 %v239
      %v422 = vunpack.c.l.b16 %v240
      %v423 = vunpack.c.h.b16 %v240
      %v424 = vunpack.c.l.b16 %v241
      %v425 = vunpack.c.h.b16 %v241
      %v426 = vunpack.c.l.b16 %v242
      %v427 = vunpack.c.h.b16 %v242
      %v428 = vunpack.c.l.b16 %v243
      %v429 = vunpack.c.h.b16 %v243
      %v430 = vunpack.c.l.b16 %v244
      %v431 = vunpack.c.h.b16 %v244
      %v432 = vunpack.c.l.b16 %v245
      %v433 = vunpack.c.h.b16 %v245
      %v434 = vunpack.c.l.b16 %v246
      %v435 = vunpack.c.h.b16 %v246
      %v436 = vunpack.c.l.b16 %v247
      %v437 = vunpack.c.h.b16 %v247
      %v438 = vunpack.c.l.b16 %v248
      %v439 = vunpack.c.h.b16 %v248
      %v440 = vunpack.c.l.b16 %v249
      %v441 = vunpack.c.h.b16 %v249
      %v442 = vunpack.c.l.b16 %v250
      %v443 = vunpack.c.h.b16 %v250
      %v444 = vunpack.c.l.b16 %v251
      %v445 = vunpack.c.h.b16 %v251
      %v446 = vunpack.c.l.b16 %v252
      %v447 = vunpack.c.h.b16 %v252
      %v448 = vunpack.c.l.b16 %v253
      %v449 = vunpack.c.h.b16 %v253
      %v450 = vunpack.c.l.b16 %v254
      %v451 = vunpack.c.h.b16 %v254
      %v452 = vunpack.c.l.b16 %v255
      %v453 = vunpack.c.h.b16 %v255
      %v454 = vunpack.c.l.b16 %v256
      %v455 = vunpack.c.h.b16 %v256
      %v456 = vunpack.c.l.b16 %v257
      %v457 = vunpack.c.h.b16 %v257
      %v458 = vunpack.c.l.b16 %v258
      %v459 = vunpack.c.h.b16 %v258
      %v460 = vunpack.c.l.b16 %v259
      %v461 = vunpack.c.h.b16 %v259
      %v462 = vunpack.c.l.b16 %v260
      %v463 = vunpack.c.h.b16 %v260
      %v464 = vunpack.c.l.b16 %v261
      %v465 = vunpack.c.h.b16 %v261
      %v466 = vunpack.c.l.b16 %v262
      %v467 = vunpack.c.h.b16 %v262
      %v468 = vunpack.c.l.b16 %v263
      %v469 = vunpack.c.h.b16 %v263
      %v470 = vunpack.c.l.b16 %v264
      %v471 = vunpack.c.h.b16 %v264
      %v472 = vunpack.c.l.b16 %v265
      %v473 = vunpack.c.h.b16 %v265
      %v474 = vunpack.c.l.b16 %v266
      %v475 = vunpack.c.h.b16 %v266
      %v476 = vunpack.c.l.b16 %v267
      %v477 = vunpack.c.h.b16 %v267
      %v478 = vunpack.c.l.b16 %v268
      %v479 = vunpack.c.h.b16 %v268
      %v480 = vpack.c.b16 %v354, %v352
      %v481 = vpack.c.b16 %v355, %v353
      %v482 = vpack.c.b16 %v358, %v356
      %v483 = vpack.c.b16 %v359, %v357
      %v484 = vpack.c.b16 %v362, %v360
      %v485 = vpack.c.b16 %v363, %v361
      %v486 = vpack.c.b16 %v366, %v364
      %v487 = vpack.c.b16 %v367, %v365
      %v488 = vpack.c.b16 %v370, %v368
      %v489 = vpack.c.b16 %v371, %v369
      %v490 = vpack.c.b16 %v374, %v372
      %v491 = vpack.c.b16 %v375, %v373
      %v492 = vpack.c.b16 %v378, %v376
      %v493 = vpack.c.b16 %v379, %v377
      %v494 = vpack.c.b16 %v382, %v380
      %v495 = vpack.c.b16 %v383, %v381
      %v496 = vpack.c.b16 %v386, %v384
      %v497 = vpack.c.b16 %v387, %v385
      %v498 = vpack.c.b16 %v390, %v388
      %v499 = vpack.c.b16 %v391, %v389
      %v500 = vpack.c.b16 %v394, %v392
      %v501 = vpack.c.b16 %v395, %v393
      %v502 = vpack.c.b16 %v398, %v396
      %v503 = vpack.c.b16 %v399, %v397
      %v504 = vpack.c.b16 %v402, %v400
      %v505 = vpack.c.b16 %v403, %v401
      %v506 = vpack.c.b16 %v406, %v404
      %v507 = vpack.c.b16 %v407, %v405
      %v508 = vpack.c.b16 %v410, %v408
      %v509 = vpack.c.b16 %v411, %v409
      %v510 = vpack.c.b16 %v414, %v412
      %v511 = vpack.c.b16 %v415, %v413
      %v512 = vpack.c.b16 %v418, %v416
      %v513 = vpack.c.b16 %v419, %v417
      %v514 = vpack.c.b16 %v422, %v420
      %v515 = vpack.c.b16 %v423, %v421
      %v516 = vpack.c.b16 %v426, %v424
      %v517 = vpack.c.b16 %v427, %v425
      %v518 = vpack.c.b16 %v430, %v428
      %v519 = vpack.c.b16 %v431, %v429
      %v520 = vpack.c.b16 %v434, %v432
      %v521 = vpack.c.b16 %v435, %v433
      %v522 = vpack.c.b16 %v438, %v436
      %v523 = vpack.c.b16 %v439, %v437
      %v524 = vpack.c.b16 %v442, %v440
      %v525 = vpack.c.b16 %v443, %v441
      %v526 = vpack.c.b16 %v446, %v444
      %v527 = vpack.c.b16 %v447, %v445
      %v528 = vpack.c.b16 %v450, %v448
      %v529 = vpack.c.b16 %v451, %v449
      %v530 = vpack.c.b16 %v454, %v452
      %v531 = vpack.c.b16 %v455, %v453
      %v532 = vpack.c.b16 %v458, %v456
      %v533 = vpack.c.b16 %v459, %v457
      %v534 = vpack.c.b16 %v462, %v460
      %v535 = vpack.c.b16 %v463, %v461
      %v536 = vpack.c.b16 %v466, %v464
      %v537 = vpack.c.b16 %v467, %v465
      %v538 = vpack.c.b16 %v470, %v468
      %v539 = vpack.c.b16 %v471, %v469
      %v540 = vpack.c.b16 %v474, %v472
      %v541 = vpack.c.b16 %v475, %v473
      %v542 = vpack.c.b16 %v478, %v476
      %v543 = vpack.c.b16 %v479, %v477
      %v595 = vunpack.c.l.b16 %v269
      %v596 = vunpack.c.l.b16 %v270
      %v597 = vunpack.c.l.b16 %v271
      %v598 = vunpack.c.l.b16 %v272
      %v599 = vunpack.c.l.b16 %v273
      %v600 = vunpack.c.l.b16 %v274
      %v601 = vunpack.c.l.b16 %v275
      %v602 = vunpack.c.l.b16 %v276
      %v603 = vunpack.c.l.b16 %v277
      %v604 = vunpack.c.l.b16 %v278
      %v605 = vunpack.c.l.b16 %v279
      %v606 = vunpack.c.l.b16 %v280
      %v607 = vunpack.c.l.b16 %v281
      %v608 = vunpack.c.l.b16 %v282
      %v609 = vunpack.c.l.b16 %v283
      %v610 = vunpack.c.l.b16 %v284
      %v611 = vunpack.c.l.b16 %v285
      %v612 = vunpack.c.l.b16 %v286
      %v613 = vunpack.c.l.b16 %v287
      %v614 = vpack.c.b16 %v596, %v595
      %v615 = vpack.c.b16 %v598, %v597
      %v616 = vpack.c.b16 %v600, %v599
      %v617 = vpack.c.b16 %v602, %v601
      %v618 = vpack.c.b16 %v604, %v603
      %v619 = vpack.c.b16 %v606, %v605
      %v620 = vpack.c.b16 %v608, %v607
      %v621 = vpack.c.b16 %v610, %v609
      %v622 = vpack.c.b16 %v612, %v611
      %v623 = vpack.c.b16 %v613, %v613
      %vm633 = vcmask 154624
      %v635 = vsel %vm633, %v481, 0
      %v638 = vsel %vm633, %v483, 0
      %v641 = vsel %vm633, %v485, 0
      %v644 = vsel %vm633, %v487, 0
      %v647 = vsel %vm633, %v489, 0
      %v650 = vsel %vm633, %v491, 0
      %v653 = vsel %vm633, %v493, 0
      %v656 = vsel %vm633, %v495, 0
      %v659 = vsel %vm633, %v497, 0
      %v662 = vsel %vm633, %v499, 0
      %v665 = vsel %vm633, %v501, 0
      %v668 = vsel %vm633, %v503, 0
      %v671 = vsel %vm633, %v505, 0
      %v674 = vsel %vm633, %v507, 0
      %v677 = vsel %vm633, %v509, 0
      %v680 = vsel %vm633, %v511, 0
      %v683 = vsel %vm633, %v513, 0
      %v686 = vsel %vm633, %v515, 0
      %v689 = vsel %vm633, %v517, 0
      %v692 = vsel %vm633, %v519, 0
      %v695 = vsel %vm633, %v521, 0
      %v698 = vsel %vm633, %v523, 0
      %v701 = vsel %vm633, %v525, 0
      %v704 = vsel %vm633, %v527, 0
      %v707 = vsel %vm633, %v529, 0
      %v710 = vsel %vm633, %v531, 0
      %v713 = vsel %vm633, %v533, 0
      %v716 = vsel %vm633, %v535, 0
      %v719 = vsel %vm633, %v537, 0
      %v722 = vsel %vm633, %v539, 0
      %v725 = vsel %vm633, %v541, 0
      %v728 = vsel %vm633, %v543, 0
      %vm730 = vcmask 1040384
      %vm731 = vcmask 1041408
      %v732 = vsel %vm730, 4294967295, 65535
      %v733 = vsel %vm731, %v732, 0
      %v735 = vand.u32 %v623, %v733
      %737 = vmatprep.subr.bf16.mxu0 0
      %738 = vmatpush1.bf16.msra.mxu0 %v614
      %739 = vmatprep.subr.bf16.mxu0 0
      %740 = vmatpush1.bf16.msra.mxu0 %v615
      %741 = vmatprep.subr.bf16.mxu0 0
      %742 = vmatpush1.bf16.msra.mxu0 %v616
      %743 = vmatprep.subr.bf16.mxu0 0
      %744 = vmatpush1.bf16.msra.mxu0 %v617
      %745 = vmatprep.subr.bf16.mxu0 0
      %746 = vmatpush1.bf16.msra.mxu0 %v618
      %747 = vmatprep.subr.bf16.mxu0 0
      %748 = vmatpush1.bf16.msra.mxu0 %v619
      %749 = vmatprep.subr.bf16.mxu0 0
      %750 = vmatpush1.bf16.msra.mxu0 %v620
      %751 = vmatprep.subr.bf16.mxu0 0
      %752 = vmatpush1.bf16.msra.mxu0 %v621
      %753 = vmatprep.subr.bf16.mxu0 0
      %754 = vmatpush1.bf16.msra.mxu0 %v622
      %755 = vmatprep.subr.bf16.mxu0 0
      %756 = vmatpush1.bf16.msra.mxu0 %v735
      %757 = vmatprep.subr.bf16.mxu0 0
      %758 = vmatpush1.bf16.msra.mxu0 0
      %759 = vmatprep.subr.bf16.mxu0 0
      %760 = vmatpush1.bf16.msra.mxu0 0
      %761 = vmatprep.subr.bf16.mxu0 0
      %762 = vmatpush1.bf16.msra.mxu0 0
      %763 = vmatprep.subr.bf16.mxu0 0
      %764 = vmatpush1.bf16.msra.mxu0 0
      %765 = vmatprep.subr.bf16.mxu0 0
      %766 = vmatpush1.bf16.msra.mxu0 0
      %767 = vmatprep.subr.bf16.mxu0 0
      %768 = vmatpush1.bf16.msra.mxu0 0
      %769 = vmatprep.mubr.bf16.mxu0 %v635
      %770 = vmatmul.mubr.bf16.gmra.mrb[0].mxu0 %v480
      %v771 = vpop.f32.mrb[0].mxu0
      %v772 = vadd.f32 0.0, %v771
      %v773 = vpop.f32.mrb[0].mxu0
      %v774 = vpop.f32.mrb[0].mxu0
      %v775 = vadd.f32 0.0, %v774
      %v776 = vpop.f32.mrb[0].mxu0
      %777 = vmatprep.mubr.bf16.mxu0 %v638
      %778 = vmatmul.mubr.bf16.gmra.mrb[0].mxu0 %v482
      %v779 = vpop.f32.mrb[0].mxu0
      %v780 = vadd.f32 0.0, %v779
      %v781 = vpop.f32.mrb[0].mxu0
      %v782 = vpop.f32.mrb[0].mxu0
      %v783 = vadd.f32 0.0, %v782
      %v784 = vpop.f32.mrb[0].mxu0
      %785 = vmatprep.mubr.bf16.mxu0 %v641
      %786 = vmatmul.mubr.bf16.gmra.mrb[0].mxu0 %v484
      %v787 = vpop.f32.mrb[0].mxu0
      %v788 = vadd.f32 0.0, %v787
      %v789 = vpop.f32.mrb[0].mxu0
      %v790 = vpop.f32.mrb[0].mxu0
      %v791 = vadd.f32 0.0, %v790
      %v792 = vpop.f32.mrb[0].mxu0
      %793 = vmatprep.mubr.bf16.mxu0 %v644
      %794 = vmatmul.mubr.bf16.gmra.mrb[0].mxu0 %v486
      %v795 = vpop.f32.mrb[0].mxu0
      %v796 = vadd.f32 0.0, %v795
      %v797 = vpop.f32.mrb[0].mxu0
      %v798 = vpop.f32.mrb[0].mxu0
      %v799 = vadd.f32 0.0, %v798
      %v800 = vpop.f32.mrb[0].mxu0
      %801 = vmatprep.mubr.bf16.mxu0 %v647
      %802 = vmatmul.mubr.bf16.gmra.mrb[0].mxu0 %v488
      %v803 = vpop.f32.mrb[0].mxu0
      %v804 = vadd.f32 0.0, %v803
      %v805 = vpop.f32.mrb[0].mxu0
      %v806 = vpop.f32.mrb[0].mxu0
      %v807 = vadd.f32 0.0, %v806
      %v808 = vpop.f32.mrb[0].mxu0
      %809 = vmatprep.mubr.bf16.mxu0 %v650
      %810 = vmatmul.mubr.bf16.gmra.mrb[0].mxu0 %v490
      %v811 = vpop.f32.mrb[0].mxu0
      %v812 = vadd.f32 0.0, %v811
      %v813 = vpop.f32.mrb[0].mxu0
      %v814 = vpop.f32.mrb[0].mxu0
      %v815 = vadd.f32 0.0, %v814
      %v816 = vpop.f32.mrb[0].mxu0
      %817 = vmatprep.mubr.bf16.mxu0 %v653
      %818 = vmatmul.mubr.bf16.gmra.mrb[0].mxu0 %v492
      %v819 = vpop.f32.mrb[0].mxu0
      %v820 = vadd.f32 0.0, %v819
      %v821 = vpop.f32.mrb[0].mxu0
      %v822 = vpop.f32.mrb[0].mxu0
      %v823 = vadd.f32 0.0, %v822
      %v824 = vpop.f32.mrb[0].mxu0
      %825 = vmatprep.mubr.bf16.mxu0 %v656
      %826 = vmatmul.mubr.bf16.gmra.mrb[0].mxu0 %v494
      %v827 = vpop.f32.mrb[0].mxu0
      %v828 = vadd.f32 0.0, %v827
      %v829 = vpop.f32.mrb[0].mxu0
      %v830 = vpop.f32.mrb[0].mxu0
      %v831 = vadd.f32 0.0, %v830
      %v832 = vpop.f32.mrb[0].mxu0
      %833 = vmatprep.mubr.bf16.mxu0 %v659
      %834 = vmatmul.mubr.bf16.gmra.mrb[0].mxu0 %v496
      %v835 = vpop.f32.mrb[0].mxu0
      %v836 = vadd.f32 0.0, %v835
      %v837 = vpop.f32.mrb[0].mxu0
      %v838 = vpop.f32.mrb[0].mxu0
      %v839 = vadd.f32 0.0, %v838
      %v840 = vpop.f32.mrb[0].mxu0
      %841 = vmatprep.mubr.bf16.mxu0 %v662
      %842 = vmatmul.mubr.bf16.gmra.mrb[0].mxu0 %v498
      %v843 = vpop.f32.mrb[0].mxu0
      %v844 = vadd.f32 0.0, %v843
      %v845 = vpop.f32.mrb[0].mxu0
      %v846 = vpop.f32.mrb[0].mxu0
      %v847 = vadd.f32 0.0, %v846
      %v848 = vpop.f32.mrb[0].mxu0
      %849 = vmatprep.mubr.bf16.mxu0 %v665
      %850 = vmatmul.mubr.bf16.gmra.mrb[0].mxu0 %v500
      %v851 = vpop.f32.mrb[0].mxu0
      %v852 = vadd.f32 0.0, %v851
      %v853 = vpop.f32.mrb[0].mxu0
      %v854 = vpop.f32.mrb[0].mxu0
      %v855 = vadd.f32 0.0, %v854
      %v856 = vpop.f32.mrb[0].mxu0
      %857 = vmatprep.mubr.bf16.mxu0 %v668
      %858 = vmatmul.mubr.bf16.gmra.mrb[0].mxu0 %v502
      %v859 = vpop.f32.mrb[0].mxu0
      %v860 = vadd.f32 0.0, %v859
      %v861 = vpop.f32.mrb[0].mxu0
      %v862 = vpop.f32.mrb[0].mxu0
      %v863 = vadd.f32 0.0, %v862
      %v864 = vpop.f32.mrb[0].mxu0
      %865 = vmatprep.mubr.bf16.mxu0 %v671
      %866 = vmatmul.mubr.bf16.gmra.mrb[0].mxu0 %v504
      %v867 = vpop.f32.mrb[0].mxu0
      %v868 = vadd.f32 0.0, %v867
      %v869 = vpop.f32.mrb[0].mxu0
      %v870 = vpop.f32.mrb[0].mxu0
      %v871 = vadd.f32 0.0, %v870
      %v872 = vpop.f32.mrb[0].mxu0
      %873 = vmatprep.mubr.bf16.mxu0 %v674
      %874 = vmatmul.mubr.bf16.gmra.mrb[0].mxu0 %v506
      %v875 = vpop.f32.mrb[0].mxu0
      %v876 = vadd.f32 0.0, %v875
      %v877 = vpop.f32.mrb[0].mxu0
      %v878 = vpop.f32.mrb[0].mxu0
      %v879 = vadd.f32 0.0, %v878
      %v880 = vpop.f32.mrb[0].mxu0
      %881 = vmatprep.mubr.bf16.mxu0 %v677
      %882 = vmatmul.mubr.bf16.gmra.mrb[0].mxu0 %v508
      %v883 = vpop.f32.mrb[0].mxu0
      %v884 = vadd.f32 0.0, %v883
      %v885 = vpop.f32.mrb[0].mxu0
      %v886 = vpop.f32.mrb[0].mxu0
      %v887 = vadd.f32 0.0, %v886
      %v888 = vpop.f32.mrb[0].mxu0
      %889 = vmatprep.mubr.bf16.mxu0 %v680
      %890 = vmatmul.mubr.bf16.gmra.mrb[0].mxu0 %v510
      %v891 = vpop.f32.mrb[0].mxu0
      %v892 = vadd.f32 0.0, %v891
      %v893 = vpop.f32.mrb[0].mxu0
      %v894 = vpop.f32.mrb[0].mxu0
      %v895 = vadd.f32 0.0, %v894
      %v896 = vpop.f32.mrb[0].mxu0
      %897 = vmatprep.mubr.bf16.mxu0 %v683
      %898 = vmatmul.mubr.bf16.gmra.mrb[0].mxu0 %v512
      %v899 = vpop.f32.mrb[0].mxu0
      %v900 = vadd.f32 0.0, %v899
      %v901 = vpop.f32.mrb[0].mxu0
      %v902 = vpop.f32.mrb[0].mxu0
      %v903 = vadd.f32 0.0, %v902
      %v904 = vpop.f32.mrb[0].mxu0
      %905 = vmatprep.mubr.bf16.mxu0 %v686
      %906 = vmatmul.mubr.bf16.gmra.mrb[0].mxu0 %v514
      %v907 = vpop.f32.mrb[0].mxu0
      %v908 = vadd.f32 0.0, %v907
      %v909 = vpop.f32.mrb[0].mxu0
      %v910 = vpop.f32.mrb[0].mxu0
      %v911 = vadd.f32 0.0, %v910
      %v912 = vpop.f32.mrb[0].mxu0
      %913 = vmatprep.mubr.bf16.mxu0 %v689
      %914 = vmatmul.mubr.bf16.gmra.mrb[0].mxu0 %v516
      %v915 = vpop.f32.mrb[0].mxu0
      %v916 = vadd.f32 0.0, %v915
      %v917 = vpop.f32.mrb[0].mxu0
      %v918 = vpop.f32.mrb[0].mxu0
      %v919 = vadd.f32 0.0, %v918
      %v920 = vpop.f32.mrb[0].mxu0
      %921 = vmatprep.mubr.bf16.mxu0 %v692
      %922 = vmatmul.mubr.bf16.gmra.mrb[0].mxu0 %v518
      %v923 = vpop.f32.mrb[0].mxu0
      %v924 = vadd.f32 0.0, %v923
      %v925 = vpop.f32.mrb[0].mxu0
      %v926 = vpop.f32.mrb[0].mxu0
      %v927 = vadd.f32 0.0, %v926
      %v928 = vpop.f32.mrb[0].mxu0
      %929 = vmatprep.mubr.bf16.mxu0 %v695
      %930 = vmatmul.mubr.bf16.gmra.mrb[0].mxu0 %v520
      %v931 = vpop.f32.mrb[0].mxu0
      %v932 = vadd.f32 0.0, %v931
      %v933 = vpop.f32.mrb[0].mxu0
      %v934 = vpop.f32.mrb[0].mxu0
      %v935 = vadd.f32 0.0, %v934
      %v936 = vpop.f32.mrb[0].mxu0
      %937 = vmatprep.mubr.bf16.mxu0 %v698
      %938 = vmatmul.mubr.bf16.gmra.mrb[0].mxu0 %v522
      %v939 = vpop.f32.mrb[0].mxu0
      %v940 = vadd.f32 0.0, %v939
      %v941 = vpop.f32.mrb[0].mxu0
      %v942 = vpop.f32.mrb[0].mxu0
      %v943 = vadd.f32 0.0, %v942
      %v944 = vpop.f32.mrb[0].mxu0
      %945 = vmatprep.mubr.bf16.mxu0 %v701
      %946 = vmatmul.mubr.bf16.gmra.mrb[0].mxu0 %v524
      %v947 = vpop.f32.mrb[0].mxu0
      %v948 = vadd.f32 0.0, %v947
      %v949 = vpop.f32.mrb[0].mxu0
      %v950 = vpop.f32.mrb[0].mxu0
      %v951 = vadd.f32 0.0, %v950
      %v952 = vpop.f32.mrb[0].mxu0
      %953 = vmatprep.mubr.bf16.mxu0 %v704
      %954 = vmatmul.mubr.bf16.gmra.mrb[0].mxu0 %v526
      %v955 = vpop.f32.mrb[0].mxu0
      %v956 = vadd.f32 0.0, %v955
      %v957 = vpop.f32.mrb[0].mxu0
      %v958 = vpop.f32.mrb[0].mxu0
      %v959 = vadd.f32 0.0, %v958
      %v960 = vpop.f32.mrb[0].mxu0
      %961 = vmatprep.mubr.bf16.mxu0 %v707
      %962 = vmatmul.mubr.bf16.gmra.mrb[0].mxu0 %v528
      %v963 = vpop.f32.mrb[0].mxu0
      %v964 = vadd.f32 0.0, %v963
      %v965 = vpop.f32.mrb[0].mxu0
      %v966 = vpop.f32.mrb[0].mxu0
      %v967 = vadd.f32 0.0, %v966
      %v968 = vpop.f32.mrb[0].mxu0
      %969 = vmatprep.mubr.bf16.mxu0 %v710
      %970 = vmatmul.mubr.bf16.gmra.mrb[0].mxu0 %v530
      %v971 = vpop.f32.mrb[0].mxu0
      %v972 = vadd.f32 0.0, %v971
      %v973 = vpop.f32.mrb[0].mxu0
      %v974 = vpop.f32.mrb[0].mxu0
      %v975 = vadd.f32 0.0, %v974
      %v976 = vpop.f32.mrb[0].mxu0
      %977 = vmatprep.mubr.bf16.mxu0 %v713
      %978 = vmatmul.mubr.bf16.gmra.mrb[0].mxu0 %v532
      %v979 = vpop.f32.mrb[0].mxu0
      %v980 = vadd.f32 0.0, %v979
      %v981 = vpop.f32.mrb[0].mxu0
      %v982 = vpop.f32.mrb[0].mxu0
      %v983 = vadd.f32 0.0, %v982
      %v984 = vpop.f32.mrb[0].mxu0
      %985 = vmatprep.mubr.bf16.mxu0 %v716
      %986 = vmatmul.mubr.bf16.gmra.mrb[0].mxu0 %v534
      %v987 = vpop.f32.mrb[0].mxu0
      %v988 = vadd.f32 0.0, %v987
      %v989 = vpop.f32.mrb[0].mxu0
      %v990 = vpop.f32.mrb[0].mxu0
      %v991 = vadd.f32 0.0, %v990
      %v992 = vpop.f32.mrb[0].mxu0
      %993 = vmatprep.mubr.bf16.mxu0 %v719
      %994 = vmatmul.mubr.bf16.gmra.mrb[0].mxu0 %v536
      %v995 = vpop.f32.mrb[0].mxu0
      %v996 = vadd.f32 0.0, %v995
      %v997 = vpop.f32.mrb[0].mxu0
      %v998 = vpop.f32.mrb[0].mxu0
      %v999 = vadd.f32 0.0, %v998
      %v1000 = vpop.f32.mrb[0].mxu0
      %1001 = vmatprep.mubr.bf16.mxu0 %v722
      %1002 = vmatmul.mubr.bf16.gmra.mrb[0].mxu0 %v538
      %v1003 = vpop.f32.mrb[0].mxu0
      %v1004 = vadd.f32 0.0, %v1003
      %v1005 = vpop.f32.mrb[0].mxu0
      %v1006 = vpop.f32.mrb[0].mxu0
      %v1007 = vadd.f32 0.0, %v1006
      %v1008 = vpop.f32.mrb[0].mxu0
      %1009 = vmatprep.mubr.bf16.mxu0 %v725
      %1010 = vmatmul.mubr.bf16.gmra.mrb[0].mxu0 %v540
      %v1011 = vpop.f32.mrb[0].mxu0
      %v1012 = vadd.f32 0.0, %v1011
      %v1013 = vpop.f32.mrb[0].mxu0
      %v1014 = vpop.f32.mrb[0].mxu0
      %v1015 = vadd.f32 0.0, %v1014
      %v1016 = vpop.f32.mrb[0].mxu0
      %1017 = vmatprep.mubr.bf16.mxu0 %v728
      %1018 = vmatmul.mubr.bf16.gmra.mrb[0].mxu0 %v542
      %v1019 = vpop.f32.mrb[0].mxu0
      %v1020 = vadd.f32 0.0, %v1019
      %v1021 = vpop.f32.mrb[0].mxu0
      %v1022 = vpop.f32.mrb[0].mxu0
      %v1023 = vadd.f32 0.0, %v1022
      %v1024 = vpop.f32.mrb[0].mxu0
      %1025 = vdwg.mxu0
      %v1026 = vld [vmem:[%s2] sm:$0x1]
      %v1028 = vlaneseq
      %v1029 = vshrl.u32 %v1028, 7
      %v1030 = vsub.s32 0, %v1029
      %v1031 = vrot.slane %v1026, %v1030
      %v1033 = vmul.f32 %v772, %v1031
      %v1034 = vmul.f32 %v775, %v1031
      %v1035 = vmul.f32 %v780, %v1031
      %v1036 = vmul.f32 %v783, %v1031
      %v1037 = vmul.f32 %v788, %v1031
      %v1038 = vmul.f32 %v791, %v1031
      %v1039 = vmul.f32 %v796, %v1031
      %v1040 = vmul.f32 %v799, %v1031
      %v1041 = vmul.f32 %v804, %v1031
      %v1042 = vmul.f32 %v807, %v1031
      %v1043 = vmul.f32 %v812, %v1031
      %v1044 = vmul.f32 %v815, %v1031
      %v1045 = vmul.f32 %v820, %v1031
      %v1046 = vmul.f32 %v823, %v1031
      %v1047 = vmul.f32 %v828, %v1031
      %v1048 = vmul.f32 %v831, %v1031
      %v1049 = vmul.f32 %v836, %v1031
      %v1050 = vmul.f32 %v839, %v1031
      %v1051 = vmul.f32 %v844, %v1031
      %v1052 = vmul.f32 %v847, %v1031
      %v1053 = vmul.f32 %v852, %v1031
      %v1054 = vmul.f32 %v855, %v1031
      %v1055 = vmul.f32 %v860, %v1031
      %v1056 = vmul.f32 %v863, %v1031
      %v1057 = vmul.f32 %v868, %v1031
      %v1058 = vmul.f32 %v871, %v1031
      %v1059 = vmul.f32 %v876, %v1031
      %v1060 = vmul.f32 %v879, %v1031
      %v1061 = vmul.f32 %v884, %v1031
      %v1062 = vmul.f32 %v887, %v1031
      %v1063 = vmul.f32 %v892, %v1031
      %v1064 = vmul.f32 %v895, %v1031
      %v1065 = vmul.f32 %v900, %v1031
      %v1066 = vmul.f32 %v903, %v1031
      %v1067 = vmul.f32 %v908, %v1031
      %v1068 = vmul.f32 %v911, %v1031
      %v1069 = vmul.f32 %v916, %v1031
      %v1070 = vmul.f32 %v919, %v1031
      %v1071 = vmul.f32 %v924, %v1031
      %v1072 = vmul.f32 %v927, %v1031
      %v1073 = vmul.f32 %v932, %v1031
      %v1074 = vmul.f32 %v935, %v1031
      %v1075 = vmul.f32 %v940, %v1031
      %v1076 = vmul.f32 %v943, %v1031
      %v1077 = vmul.f32 %v948, %v1031
      %v1078 = vmul.f32 %v951, %v1031
      %v1079 = vmul.f32 %v956, %v1031
      %v1080 = vmul.f32 %v959, %v1031
      %v1081 = vmul.f32 %v964, %v1031
      %v1082 = vmul.f32 %v967, %v1031
      %v1083 = vmul.f32 %v972, %v1031
      %v1084 = vmul.f32 %v975, %v1031
      %v1085 = vmul.f32 %v980, %v1031
      %v1086 = vmul.f32 %v983, %v1031
      %v1087 = vmul.f32 %v988, %v1031
      %v1088 = vmul.f32 %v991, %v1031
      %v1089 = vmul.f32 %v996, %v1031
      %v1090 = vmul.f32 %v999, %v1031
      %v1091 = vmul.f32 %v1004, %v1031
      %v1092 = vmul.f32 %v1007, %v1031
      %v1093 = vmul.f32 %v1012, %v1031
      %v1094 = vmul.f32 %v1015, %v1031
      %v1095 = vmul.f32 %v1020, %v1031
      %v1096 = vmul.f32 %v1023, %v1031
      %v1097 = vld [vmem:[%s3] sm:$0x1]
      %v1099 = vlaneseq
      %v1100 = vshrl.u32 %v1099, 7
      %v1101 = vsub.s32 0, %v1100
      %v1102 = vrot.slane %v1097, %v1101
      %v1104 = vadd.f32 %v1033, %v1102
      %v1105 = vadd.f32 %v1034, %v1102
      %v1106 = vadd.f32 %v1035, %v1102
      %v1107 = vadd.f32 %v1036, %v1102
      %v1108 = vadd.f32 %v1037, %v1102
      %v1109 = vadd.f32 %v1038, %v1102
      %v1110 = vadd.f32 %v1039, %v1102
      %v1111 = vadd.f32 %v1040, %v1102
      %v1112 = vadd.f32 %v1041, %v1102
      %v1113 = vadd.f32 %v1042, %v1102
      %v1114 = vadd.f32 %v1043, %v1102
      %v1115 = vadd.f32 %v1044, %v1102
      %v1116 = vadd.f32 %v1045, %v1102
      %v1117 = vadd.f32 %v1046, %v1102
      %v1118 = vadd.f32 %v1047, %v1102
      %v1119 = vadd.f32 %v1048, %v1102
      %v1120 = vadd.f32 %v1049, %v1102
      %v1121 = vadd.f32 %v1050, %v1102
      %v1122 = vadd.f32 %v1051, %v1102
      %v1123 = vadd.f32 %v1052, %v1102
      %v1124 = vadd.f32 %v1053, %v1102
      %v1125 = vadd.f32 %v1054, %v1102
      %v1126 = vadd.f32 %v1055, %v1102
      %v1127 = vadd.f32 %v1056, %v1102
      %v1128 = vadd.f32 %v1057, %v1102
      %v1129 = vadd.f32 %v1058, %v1102
      %v1130 = vadd.f32 %v1059, %v1102
      %v1131 = vadd.f32 %v1060, %v1102
      %v1132 = vadd.f32 %v1061, %v1102
      %v1133 = vadd.f32 %v1062, %v1102
      %v1134 = vadd.f32 %v1063, %v1102
      %v1135 = vadd.f32 %v1064, %v1102
      %v1136 = vadd.f32 %v1065, %v1102
      %v1137 = vadd.f32 %v1066, %v1102
      %v1138 = vadd.f32 %v1067, %v1102
      %v1139 = vadd.f32 %v1068, %v1102
      %v1140 = vadd.f32 %v1069, %v1102
      %v1141 = vadd.f32 %v1070, %v1102
      %v1142 = vadd.f32 %v1071, %v1102
      %v1143 = vadd.f32 %v1072, %v1102
      %v1144 = vadd.f32 %v1073, %v1102
      %v1145 = vadd.f32 %v1074, %v1102
      %v1146 = vadd.f32 %v1075, %v1102
      %v1147 = vadd.f32 %v1076, %v1102
      %v1148 = vadd.f32 %v1077, %v1102
      %v1149 = vadd.f32 %v1078, %v1102
      %v1150 = vadd.f32 %v1079, %v1102
      %v1151 = vadd.f32 %v1080, %v1102
      %v1152 = vadd.f32 %v1081, %v1102
      %v1153 = vadd.f32 %v1082, %v1102
      %v1154 = vadd.f32 %v1083, %v1102
      %v1155 = vadd.f32 %v1084, %v1102
      %v1156 = vadd.f32 %v1085, %v1102
      %v1157 = vadd.f32 %v1086, %v1102
      %v1158 = vadd.f32 %v1087, %v1102
      %v1159 = vadd.f32 %v1088, %v1102
      %v1160 = vadd.f32 %v1089, %v1102
      %v1161 = vadd.f32 %v1090, %v1102
      %v1162 = vadd.f32 %v1091, %v1102
      %v1163 = vadd.f32 %v1092, %v1102
      %v1164 = vadd.f32 %v1093, %v1102
      %v1165 = vadd.f32 %v1094, %v1102
      %v1166 = vadd.f32 %v1095, %v1102
      %v1167 = vadd.f32 %v1096, %v1102
      %v1168 = vmax.f32 %v1104, 0.0
      %v1169 = vmax.f32 %v1105, 0.0
      %v1170 = vmax.f32 %v1106, 0.0
      %v1171 = vmax.f32 %v1107, 0.0
      %v1172 = vmax.f32 %v1108, 0.0
      %v1173 = vmax.f32 %v1109, 0.0
      %v1174 = vmax.f32 %v1110, 0.0
      %v1175 = vmax.f32 %v1111, 0.0
      %v1176 = vmax.f32 %v1112, 0.0
      %v1177 = vmax.f32 %v1113, 0.0
      %v1178 = vmax.f32 %v1114, 0.0
      %v1179 = vmax.f32 %v1115, 0.0
      %v1180 = vmax.f32 %v1116, 0.0
      %v1181 = vmax.f32 %v1117, 0.0
      %v1182 = vmax.f32 %v1118, 0.0
      %v1183 = vmax.f32 %v1119, 0.0
      %v1184 = vmax.f32 %v1120, 0.0
      %v1185 = vmax.f32 %v1121, 0.0
      %v1186 = vmax.f32 %v1122, 0.0
      %v1187 = vmax.f32 %v1123, 0.0
      %v1188 = vmax.f32 %v1124, 0.0
      %v1189 = vmax.f32 %v1125, 0.0
      %v1190 = vmax.f32 %v1126, 0.0
      %v1191 = vmax.f32 %v1127, 0.0
      %v1192 = vmax.f32 %v1128, 0.0
      %v1193 = vmax.f32 %v1129, 0.0
      %v1194 = vmax.f32 %v1130, 0.0
      %v1195 = vmax.f32 %v1131, 0.0
      %v1196 = vmax.f32 %v1132, 0.0
      %v1197 = vmax.f32 %v1133, 0.0
      %v1198 = vmax.f32 %v1134, 0.0
      %v1199 = vmax.f32 %v1135, 0.0
      %v1200 = vmax.f32 %v1136, 0.0
      %v1201 = vmax.f32 %v1137, 0.0
      %v1202 = vmax.f32 %v1138, 0.0
      %v1203 = vmax.f32 %v1139, 0.0
      %v1204 = vmax.f32 %v1140, 0.0
      %v1205 = vmax.f32 %v1141, 0.0
      %v1206 = vmax.f32 %v1142, 0.0
      %v1207 = vmax.f32 %v1143, 0.0
      %v1208 = vmax.f32 %v1144, 0.0
      %v1209 = vmax.f32 %v1145, 0.0
      %v1210 = vmax.f32 %v1146, 0.0
      %v1211 = vmax.f32 %v1147, 0.0
      %v1212 = vmax.f32 %v1148, 0.0
      %v1213 = vmax.f32 %v1149, 0.0
      %v1214 = vmax.f32 %v1150, 0.0
      %v1215 = vmax.f32 %v1151, 0.0
      %v1216 = vmax.f32 %v1152, 0.0
      %v1217 = vmax.f32 %v1153, 0.0
      %v1218 = vmax.f32 %v1154, 0.0
      %v1219 = vmax.f32 %v1155, 0.0
      %v1220 = vmax.f32 %v1156, 0.0
      %v1221 = vmax.f32 %v1157, 0.0
      %v1222 = vmax.f32 %v1158, 0.0
      %v1223 = vmax.f32 %v1159, 0.0
      %v1224 = vmax.f32 %v1160, 0.0
      %v1225 = vmax.f32 %v1161, 0.0
      %v1226 = vmax.f32 %v1162, 0.0
      %v1227 = vmax.f32 %v1163, 0.0
      %v1228 = vmax.f32 %v1164, 0.0
      %v1229 = vmax.f32 %v1165, 0.0
      %v1230 = vmax.f32 %v1166, 0.0
      %v1231 = vmax.f32 %v1167, 0.0
      %v1232 = vpack.c.bf16 %v1169, %v1168
      %v1233 = vpack.c.bf16 %v1171, %v1170
      %v1234 = vpack.c.bf16 %v1173, %v1172
      %v1235 = vpack.c.bf16 %v1175, %v1174
      %v1236 = vpack.c.bf16 %v1177, %v1176
      %v1237 = vpack.c.bf16 %v1179, %v1178
      %v1238 = vpack.c.bf16 %v1181, %v1180
      %v1239 = vpack.c.bf16 %v1183, %v1182
      %v1240 = vpack.c.bf16 %v1185, %v1184
      %v1241 = vpack.c.bf16 %v1187, %v1186
      %v1242 = vpack.c.bf16 %v1189, %v1188
      %v1243 = vpack.c.bf16 %v1191, %v1190
      %v1244 = vpack.c.bf16 %v1193, %v1192
      %v1245 = vpack.c.bf16 %v1195, %v1194
      %v1246 = vpack.c.bf16 %v1197, %v1196
      %v1247 = vpack.c.bf16 %v1199, %v1198
      %v1248 = vpack.c.bf16 %v1201, %v1200
      %v1249 = vpack.c.bf16 %v1203, %v1202
      %v1250 = vpack.c.bf16 %v1205, %v1204
      %v1251 = vpack.c.bf16 %v1207, %v1206
      %v1252 = vpack.c.bf16 %v1209, %v1208
      %v1253 = vpack.c.bf16 %v1211, %v1210
      %v1254 = vpack.c.bf16 %v1213, %v1212
      %v1255 = vpack.c.bf16 %v1215, %v1214
      %v1256 = vpack.c.bf16 %v1217, %v1216
      %v1257 = vpack.c.bf16 %v1219, %v1218
      %v1258 = vpack.c.bf16 %v1221, %v1220
      %v1259 = vpack.c.bf16 %v1223, %v1222
      %v1260 = vpack.c.bf16 %v1225, %v1224
      %v1261 = vpack.c.bf16 %v1227, %v1226
      %v1262 = vpack.c.bf16 %v1229, %v1228
      %v1263 = vpack.c.bf16 %v1231, %v1230
      %v1296 = vunpack.c.l.b16 %v1232
      %v1297 = vunpack.c.h.b16 %v1232
      %v1298 = vunpack.c.l.b16 %v1233
      %v1299 = vunpack.c.h.b16 %v1233
      %v1300 = vunpack.c.l.b16 %v1234
      %v1301 = vunpack.c.h.b16 %v1234
      %v1302 = vunpack.c.l.b16 %v1235
      %v1303 = vunpack.c.h.b16 %v1235
      %v1304 = vunpack.c.l.b16 %v1236
      %v1305 = vunpack.c.h.b16 %v1236
      %v1306 = vunpack.c.l.b16 %v1237
      %v1307 = vunpack.c.h.b16 %v1237
      %v1308 = vunpack.c.l.b16 %v1238
      %v1309 = vunpack.c.h.b16 %v1238
      %v1310 = vunpack.c.l.b16 %v1239
      %v1311 = vunpack.c.h.b16 %v1239
      %v1312 = vunpack.c.l.b16 %v1240
      %v1313 = vunpack.c.h.b16 %v1240
      %v1314 = vunpack.c.l.b16 %v1241
      %v1315 = vunpack.c.h.b16 %v1241
      %v1316 = vunpack.c.l.b16 %v1242
      %v1317 = vunpack.c.h.b16 %v1242
      %v1318 = vunpack.c.l.b16 %v1243
      %v1319 = vunpack.c.h.b16 %v1243
      %v1320 = vunpack.c.l.b16 %v1244
      %v1321 = vunpack.c.h.b16 %v1244
      %v1322 = vunpack.c.l.b16 %v1245
      %v1323 = vunpack.c.h.b16 %v1245
      %v1324 = vunpack.c.l.b16 %v1246
      %v1325 = vunpack.c.h.b16 %v1246
      %v1326 = vunpack.c.l.b16 %v1247
      %v1327 = vunpack.c.h.b16 %v1247
      %v1328 = vunpack.c.l.b16 %v1248
      %v1329 = vunpack.c.h.b16 %v1248
      %v1330 = vunpack.c.l.b16 %v1249
      %v1331 = vunpack.c.h.b16 %v1249
      %v1332 = vunpack.c.l.b16 %v1250
      %v1333 = vunpack.c.h.b16 %v1250
      %v1334 = vunpack.c.l.b16 %v1251
      %v1335 = vunpack.c.h.b16 %v1251
      %v1336 = vunpack.c.l.b16 %v1252
      %v1337 = vunpack.c.h.b16 %v1252
      %v1338 = vunpack.c.l.b16 %v1253
      %v1339 = vunpack.c.h.b16 %v1253
      %v1340 = vunpack.c.l.b16 %v1254
      %v1341 = vunpack.c.h.b16 %v1254
      %v1342 = vunpack.c.l.b16 %v1255
      %v1343 = vunpack.c.h.b16 %v1255
      %v1344 = vunpack.c.l.b16 %v1256
      %v1345 = vunpack.c.h.b16 %v1256
      %v1346 = vunpack.c.l.b16 %v1257
      %v1347 = vunpack.c.h.b16 %v1257
      %v1348 = vunpack.c.l.b16 %v1258
      %v1349 = vunpack.c.h.b16 %v1258
      %v1350 = vunpack.c.l.b16 %v1259
      %v1351 = vunpack.c.h.b16 %v1259
      %v1352 = vunpack.c.l.b16 %v1260
      %v1353 = vunpack.c.h.b16 %v1260
      %v1354 = vunpack.c.l.b16 %v1261
      %v1355 = vunpack.c.h.b16 %v1261
      %v1356 = vunpack.c.l.b16 %v1262
      %v1357 = vunpack.c.h.b16 %v1262
      %v1358 = vunpack.c.l.b16 %v1263
      %v1359 = vunpack.c.h.b16 %v1263
      %v1360 = vpack.c.b16 %v1296, %v1296
      %v1361 = vpack.c.b16 %v1297, %v1297
      %v1362 = vpack.c.b16 %v1298, %v1298
      %v1363 = vpack.c.b16 %v1299, %v1299
      %v1364 = vpack.c.b16 %v1300, %v1300
      %v1365 = vpack.c.b16 %v1301, %v1301
      %v1366 = vpack.c.b16 %v1302, %v1302
      %v1367 = vpack.c.b16 %v1303, %v1303
      %v1368 = vpack.c.b16 %v1304, %v1304
      %v1369 = vpack.c.b16 %v1305, %v1305
      %v1370 = vpack.c.b16 %v1306, %v1306
      %v1371 = vpack.c.b16 %v1307, %v1307
      %v1372 = vpack.c.b16 %v1308, %v1308
      %v1373 = vpack.c.b16 %v1309, %v1309
      %v1374 = vpack.c.b16 %v1310, %v1310
      %v1375 = vpack.c.b16 %v1311, %v1311
      %v1376 = vpack.c.b16 %v1312, %v1312
      %v1377 = vpack.c.b16 %v1313, %v1313
      %v1378 = vpack.c.b16 %v1314, %v1314
      %v1379 = vpack.c.b16 %v1315, %v1315
      %v1380 = vpack.c.b16 %v1316, %v1316
      %v1381 = vpack.c.b16 %v1317, %v1317
      %v1382 = vpack.c.b16 %v1318, %v1318
      %v1383 = vpack.c.b16 %v1319, %v1319
      %v1384 = vpack.c.b16 %v1320, %v1320
      %v1385 = vpack.c.b16 %v1321, %v1321
      %v1386 = vpack.c.b16 %v1322, %v1322
      %v1387 = vpack.c.b16 %v1323, %v1323
      %v1388 = vpack.c.b16 %v1324, %v1324
      %v1389 = vpack.c.b16 %v1325, %v1325
      %v1390 = vpack.c.b16 %v1326, %v1326
      %v1391 = vpack.c.b16 %v1327, %v1327
      %v1392 = vpack.c.b16 %v1328, %v1328
      %v1393 = vpack.c.b16 %v1329, %v1329
      %v1394 = vpack.c.b16 %v1330, %v1330
      %v1395 = vpack.c.b16 %v1331, %v1331
      %v1396 = vpack.c.b16 %v1332, %v1332
      %v1397 = vpack.c.b16 %v1333, %v1333
      %v1398 = vpack.c.b16 %v1334, %v1334
      %v1399 = vpack.c.b16 %v1335, %v1335
      %v1400 = vpack.c.b16 %v1336, %v1336
      %v1401 = vpack.c.b16 %v1337, %v1337
      %v1402 = vpack.c.b16 %v1338, %v1338
      %v1403 = vpack.c.b16 %v1339, %v1339
      %v1404 = vpack.c.b16 %v1340, %v1340
      %v1405 = vpack.c.b16 %v1341, %v1341
      %v1406 = vpack.c.b16 %v1342, %v1342
      %v1407 = vpack.c.b16 %v1343, %v1343
      %v1408 = vpack.c.b16 %v1344, %v1344
      %v1409 = vpack.c.b16 %v1345, %v1345
      %v1410 = vpack.c.b16 %v1346, %v1346
      %v1411 = vpack.c.b16 %v1347, %v1347
      %v1412 = vpack.c.b16 %v1348, %v1348
      %v1413 = vpack.c.b16 %v1349, %v1349
      %v1414 = vpack.c.b16 %v1350, %v1350
      %v1415 = vpack.c.b16 %v1351, %v1351
      %v1416 = vpack.c.b16 %v1352, %v1352
      %v1417 = vpack.c.b16 %v1353, %v1353
      %v1418 = vpack.c.b16 %v1354, %v1354
      %v1419 = vpack.c.b16 %v1355, %v1355
      %v1420 = vpack.c.b16 %v1356, %v1356
      %v1421 = vpack.c.b16 %v1357, %v1357
      %v1422 = vpack.c.b16 %v1358, %v1358
      %v1423 = vpack.c.b16 %v1359, %v1359
      %vm1488 = vcmask 519168
      %1489 = vst.msk [vmem:[%s202] sm:$0xf] %vm1488, %v1360
      %1490 = vst.msk [vmem:[%s202 + $0x4] sm:$0xf] %vm1488, %v1361
      %1491 = vst.msk [vmem:[%s202 + $0x8] sm:$0xf] %vm1488, %v1362
      %1492 = vst.msk [vmem:[%s202 + $0xc] sm:$0xf] %vm1488, %v1363
      %1493 = vst.msk [vmem:[%s202 + $0x10] sm:$0xf] %vm1488, %v1364
      %1494 = vst.msk [vmem:[%s202 + $0x14] sm:$0xf] %vm1488, %v1365
      %1495 = vst.msk [vmem:[%s202 + $0x18] sm:$0xf] %vm1488, %v1366
      %1496 = vst.msk [vmem:[%s202 + $0x1c] sm:$0xf] %vm1488, %v1367
      %1497 = vst.msk [vmem:[%s202 + $0x20] sm:$0xf] %vm1488, %v1368
      %1498 = vst.msk [vmem:[%s202 + $0x24] sm:$0xf] %vm1488, %v1369
      %1499 = vst.msk [vmem:[%s202 + $0x28] sm:$0xf] %vm1488, %v1370
      %1500 = vst.msk [vmem:[%s202 + $0x2c] sm:$0xf] %vm1488, %v1371
      %1501 = vst.msk [vmem:[%s202 + $0x30] sm:$0xf] %vm1488, %v1372
      %1502 = vst.msk [vmem:[%s202 + $0x34] sm:$0xf] %vm1488, %v1373
      %1503 = vst.msk [vmem:[%s202 + $0x38] sm:$0xf] %vm1488, %v1374
      %1504 = vst.msk [vmem:[%s202 + $0x3c] sm:$0xf] %vm1488, %v1375
      %1505 = vst.msk [vmem:[%s202 + $0x40] sm:$0xf] %vm1488, %v1376
      %1506 = vst.msk [vmem:[%s202 + $0x44] sm:$0xf] %vm1488, %v1377
      %1507 = vst.msk [vmem:[%s202 + $0x48] sm:$0xf] %vm1488, %v1378
      %1508 = vst.msk [vmem:[%s202 + $0x4c] sm:$0xf] %vm1488, %v1379
      %1509 = vst.msk [vmem:[%s202 + $0x50] sm:$0xf] %vm1488, %v1380
      %1510 = vst.msk [vmem:[%s202 + $0x54] sm:$0xf] %vm1488, %v1381
      %1511 = vst.msk [vmem:[%s202 + $0x58] sm:$0xf] %vm1488, %v1382
      %1512 = vst.msk [vmem:[%s202 + $0x5c] sm:$0xf] %vm1488, %v1383
      %1513 = vst.msk [vmem:[%s202 + $0x60] sm:$0xf] %vm1488, %v1384
      %1514 = vst.msk [vmem:[%s202 + $0x64] sm:$0xf] %vm1488, %v1385
      %1515 = vst.msk [vmem:[%s202 + $0x68] sm:$0xf] %vm1488, %v1386
      %1516 = vst.msk [vmem:[%s202 + $0x6c] sm:$0xf] %vm1488, %v1387
      %1517 = vst.msk [vmem:[%s202 + $0x70] sm:$0xf] %vm1488, %v1388
      %1518 = vst.msk [vmem:[%s202 + $0x74] sm:$0xf] %vm1488, %v1389
      %1519 = vst.msk [vmem:[%s202 + $0x78] sm:$0xf] %vm1488, %v1390
      %1520 = vst.msk [vmem:[%s202 + $0x7c] sm:$0xf] %vm1488, %v1391
      %1521 = vst.msk [vmem:[%s202 + $0x80] sm:$0xf] %vm1488, %v1392
      %1522 = vst.msk [vmem:[%s202 + $0x84] sm:$0xf] %vm1488, %v1393
      %1523 = vst.msk [vmem:[%s202 + $0x88] sm:$0xf] %vm1488, %v1394
      %1524 = vst.msk [vmem:[%s202 + $0x8c] sm:$0xf] %vm1488, %v1395
      %1525 = vst.msk [vmem:[%s202 + $0x90] sm:$0xf] %vm1488, %v1396
      %1526 = vst.msk [vmem:[%s202 + $0x94] sm:$0xf] %vm1488, %v1397
      %1527 = vst.msk [vmem:[%s202 + $0x98] sm:$0xf] %vm1488, %v1398
      %1528 = vst.msk [vmem:[%s202 + $0x9c] sm:$0xf] %vm1488, %v1399
      %1529 = vst.msk [vmem:[%s202 + $0xa0] sm:$0xf] %vm1488, %v1400
      %1530 = vst.msk [vmem:[%s202 + $0xa4] sm:$0xf] %vm1488, %v1401
      %1531 = vst.msk [vmem:[%s202 + $0xa8] sm:$0xf] %vm1488, %v1402
      %1532 = vst.msk [vmem:[%s202 + $0xac] sm:$0xf] %vm1488, %v1403
      %1533 = vst.msk [vmem:[%s202 + $0xb0] sm:$0xf] %vm1488, %v1404
      %1534 = vst.msk [vmem:[%s202 + $0xb4] sm:$0xf] %vm1488, %v1405
      %1535 = vst.msk [vmem:[%s202 + $0xb8] sm:$0xf] %vm1488, %v1406
      %1536 = vst.msk [vmem:[%s202 + $0xbc] sm:$0xf] %vm1488, %v1407
      %1537 = vst.msk [vmem:[%s202 + $0xc0] sm:$0xf] %vm1488, %v1408
      %1538 = vst.msk [vmem:[%s202 + $0xc4] sm:$0xf] %vm1488, %v1409
      %1539 = vst.msk [vmem:[%s202 + $0xc8] sm:$0xf] %vm1488, %v1410
      %1540 = vst.msk [vmem:[%s202 + $0xcc] sm:$0xf] %vm1488, %v1411
      %1541 = vst.msk [vmem:[%s202 + $0xd0] sm:$0xf] %vm1488, %v1412
      %1542 = vst.msk [vmem:[%s202 + $0xd4] sm:$0xf] %vm1488, %v1413
      %1543 = vst.msk [vmem:[%s202 + $0xd8] sm:$0xf] %vm1488, %v1414
      %1544 = vst.msk [vmem:[%s202 + $0xdc] sm:$0xf] %vm1488, %v1415
      %1545 = vst.msk [vmem:[%s202 + $0xe0] sm:$0xf] %vm1488, %v1416
      %1546 = vst.msk [vmem:[%s202 + $0xe4] sm:$0xf] %vm1488, %v1417
      %1547 = vst.msk [vmem:[%s202 + $0xe8] sm:$0xf] %vm1488, %v1418
      %1548 = vst.msk [vmem:[%s202 + $0xec] sm:$0xf] %vm1488, %v1419
      %1549 = vst.msk [vmem:[%s202 + $0xf0] sm:$0xf] %vm1488, %v1420
      %1550 = vst.msk [vmem:[%s202 + $0xf4] sm:$0xf] %vm1488, %v1421
      %1551 = vst.msk [vmem:[%s202 + $0xf8] sm:$0xf] %vm1488, %v1422
      %1552 = vst.msk [vmem:[%s202 + $0xfc] sm:$0xf] %vm1488, %v1423
      %s1553 = smul.u32 64, %s15
      %p1554 = scmp.lt.s32.totalorder %s1553, 255
      %s1555 = scalar_select %p1554, %s1553, 255
      %s1556 = smul.addr %s1555, 4
      %s1557 = scalar_lea.vmem %s4, %s1556
      // Predicated region
      $region37: #{tpu_custom_call.1} parent=35 // pred_check
        %p1558 = pneg %p122
      $region38: #{tpu_custom_call.1} parent=35 // pred_check_branch
        %1560 = sbr.rel (%p1558) target = $region40
      $region39: #{tpu_custom_call.1} parent=35 // pred_region
        %s1561 = smul.u32 64, %s15
      $region40: #{tpu_custom_call.1} parent=35 // pred_fallthru
        _
    $region36: #{tpu_custom_call.1} parent=5 // pred_fallthru
      _
    %p1562 = scmp.le.s32.totalorder 2, %s10
    // Predicated region
    $region41: #{tpu_custom_call.1} parent=5 // pred_check
      %p1563 = pneg %p1562
    $region42: #{tpu_custom_call.1} parent=5 // pred_check_branch
      %1565 = sbr.rel (%p1563) target = $region44
    $region43: #{tpu_custom_call.1} parent=5 // pred_region
      %s1566 = ssub.s32 %s10, 2
      // Predicated region
      $region45: #{tpu_custom_call.1} parent=43 // pred_check
        %p1567 = pneg %p128
      $region46: #{tpu_custom_call.1} parent=43 // pred_check_branch
        %1569 = sbr.rel (%p1567) target = $region48
      $region47: #{tpu_custom_call.1} parent=43 // pred_region
        %s1570 = smul.u32 64, %s16
        %p1571 = scmp.lt.s32.totalorder %s1570, 255
        %s1572 = scalar_select %p1571, %s1570, 255
        %s1573 = smul.addr %s1572, 4
        %s1574 = scalar_lea.vmem %s4, %s1573
      $region48: #{tpu_custom_call.1} parent=43 // pred_fallthru
        _
    $region44: #{tpu_custom_call.1} parent=5 // pred_fallthru
      _
  $region6: #{tpu_custom_call.1} parent=0 // loop_footer
    %s14 = sadd.s32 1, %s10
  $region7: #{tpu_custom_call.1} parent=0 // loop_footer_branch
    %9 = sbr.rel target = $region3
  $region8: #{tpu_custom_call.1} parent=0 // loop_exit
    _

</llo_original>
